<compile_context>
chip_gen: v7x
topology: tpu7x:2x2x1
jax: 0.10.0
libtpu: 0.0.40
codegen_flags: <defaults>
</compile_context>

<pallas_src>
import jax
import jax.numpy as jnp
import numpy as np
from jax.experimental import pallas as pl
from jax.experimental.pallas import tpu as pltpu

FEAT = 512      # resnet feature width (input of nn.Linear(512, 4))
H = 4           # linear out / LSTM input / LSTM hidden size
G = 4 * H       # gate width (i, f, g, o)
STEPS = 19      # python loop length in MyModel.forward
PK_ROWS = 16    # rows of the packed parameter buffer


def _softmax_rows(v):
    v = v - jnp.max(v, axis=1, keepdims=True)
    e = jnp.exp(v)
    return e / jnp.sum(e, axis=1, keepdims=True)   # exact division (1e-5 tolerance)


def mymodel_kernel(feat_ref, wlin_ref, pk_ref, out_ref):
    # ---- unpack the single packed parameter buffer (static slices, loaded once) ----
    wih_t  = pk_ref[0:4, :]                                   # (H, 4H), 0.5 folded on i/f/o cols
    w_rows = [pk_ref[4 + k:5 + k, :] for k in range(H)]       # rows of scaled W_hh^T, each (1, 4H)
    bias   = pk_ref[8:9, :]                                   # (1, 4H)  (b_ih+b_hh) pre-scaled
    fix_s  = pk_ref[9:10, :]                                  # (1, 4H)  0.5 on i/f/o, 1 on g
    fix_o  = pk_ref[10:11, :]                                 # (1, 4H)  0.5 on i/f/o, 0 on g
    blin   = pk_ref[11:12, 0:H]                               # (1, H)
    h      = pk_ref[12:13, 0:H]                               # (1, H)   h0
    c      = pk_ref[13:14, 0:H]                               # (1, H)   c0

    # ---- step-independent part, batched over all 19 steps (one MXU pass each) ----
    feats = feat_ref[...]                                     # (STEPS, FEAT)
    logits = jnp.dot(feats, wlin_ref[...],
                     preferred_element_type=jnp.float32) + blin          # (STEPS, H)
    y = _softmax_rows(logits)                                            # (STEPS, H)
    # gx[t] = scale * (softmax(lin(x_t)) @ W_ih^T + b_ih + b_hh), 0.5 on i/f/o lanes
    gx = jnp.dot(y, wih_t, preferred_element_type=jnp.float32) + bias    # (STEPS, 4H)
    # pre-extract the 19 rows into vregs, off the h/c-dependent critical path
    gx_rows = [gx[t:t + 1, :] for t in range(STEPS)]                     # each (1, 4H)

    # ---- serial 19-step LSTM recurrence, h/c carried in registers ----
    for t in range(STEPS):                                               # fully unrolled
        # h @ (scaled W_hh^T): 4 static-lane broadcast-FMAs, register-only
        hh = (h[:, 0:1] * w_rows[0] + h[:, 1:2] * w_rows[1]
              + h[:, 2:3] * w_rows[2] + h[:, 3:4] * w_rows[3])           # (1, 4H)
        # single EUP pass over all gates: tanh of pre-scaled pre-activations,
        # then a VPU fixup:  i/f/o lanes -> 0.5*tanh(z/2)+0.5 = sigmoid(z),
        #                    g lanes     -> tanh(z)
        a = jnp.tanh(gx_rows[t] + hh) * fix_s + fix_o                    # (1, 4H)
        i_g = a[:, 0 * H:1 * H]
        f_g = a[:, 1 * H:2 * H]
        g_g = a[:, 2 * H:3 * H]
        o_g = a[:, 3 * H:4 * H]
        c = f_g * c + i_g * g_g
        h = o_g * jnp.tanh(c)                                            # 2nd EUP pass

    # after the 19-step loop: lstm_outputs.view(1,4) -> Softmax(dim=1)
    out_ref[...] = _softmax_rows(h)


def mymodel_forward(x, params):
    """x: (1, STEPS, FEAT) float32 -> (1, 4) float32."""
    feats = x[0]                                              # (STEPS, FEAT)
    vmem = lambda: pl.BlockSpec(memory_space=pltpu.MemorySpace.VMEM)
    return pl.pallas_call(
        mymodel_kernel,
        out_shape=jax.ShapeDtypeStruct((1, H), jnp.float32),
        in_specs=[vmem(), vmem(), vmem()],
        out_specs=vmem(),
    )(feats, params["wlin_t"], params["packed"])


def pack_params(wlin, blin, wih, whh, bih, bhh, h0, c0):
    """Fold the sigmoid-as-tanh 0.5 pre-scale into the weights and pack every
    small parameter into one lane-padded (PK_ROWS, 4H) f32 buffer."""
    col_scale = np.ones((G,), np.float32)
    col_scale[0:2 * H] = 0.5          # i, f gates
    col_scale[3 * H:4 * H] = 0.5      # o gate            (g stays 1.0)
    fix_scale = col_scale.copy()                               # 0.5 on i/f/o, 1 on g
    fix_off = np.where(col_scale == 0.5, 0.5, 0.0).astype(np.float32)

    pk = np.zeros((PK_ROWS, G), np.float32)
    pk[0:4, :] = np.asarray(wih).T * col_scale[None, :]        # scaled W_ih^T  (H, 4H)
    pk[4:8, :] = np.asarray(whh).T * col_scale[None, :]        # scaled W_hh^T  (H, 4H)
    pk[8, :] = (np.asarray(bih) + np.asarray(bhh)).reshape(G) * col_scale
    pk[9, :] = fix_scale
    pk[10, :] = fix_off
    pk[11, 0:H] = np.asarray(blin).reshape(H)
    pk[12, 0:H] = np.asarray(h0).reshape(H)
    pk[13, 0:H] = np.asarray(c0).reshape(H)
    return dict(wlin_t=jnp.asarray(np.asarray(wlin).T),        # (FEAT, H)
                packed=jnp.asarray(pk))                        # (PK_ROWS, 4H)


def ref_forward(x, wlin, blin, wih, whh, bih, bhh, h0, c0):
    h, c = h0, c0
    for i in range(STEPS):
        y = x[0, i:i + 1] @ wlin.T + blin
        y = jax.nn.softmax(y, axis=1)
        gates = y @ wih.T + bih + h @ whh.T + bhh
        ig = jax.nn.sigmoid(gates[:, :H])
        fg = jax.nn.sigmoid(gates[:, H:2 * H])
        gg = jnp.tanh(gates[:, 2 * H:3 * H])
        og = jax.nn.sigmoid(gates[:, 3 * H:])
        c = fg * c + ig * gg
        h = og * jnp.tanh(c)
    return jax.nn.softmax(h, axis=1)


if __name__ == "__main__":
    key = jax.random.PRNGKey(0)
    ks = jax.random.split(key, 9)

    # nn.Linear(512, 4): U(-1/sqrt(512), 1/sqrt(512))
    lim_lin = 1.0 / np.sqrt(FEAT)
    wlin = jax.random.uniform(ks[0], (H, FEAT), jnp.float32, -lim_lin, lim_lin)   # (out, in)
    blin = jax.random.uniform(ks[1], (1, H), jnp.float32, -lim_lin, lim_lin)

    # nn.LSTM(4, 4): U(-1/sqrt(4), 1/sqrt(4)); gate order [i, f, g, o]
    lim_lstm = 1.0 / np.sqrt(H)
    wih = jax.random.uniform(ks[2], (4 * H, H), jnp.float32, -lim_lstm, lim_lstm)
    whh = jax.random.uniform(ks[3], (4 * H, H), jnp.float32, -lim_lstm, lim_lstm)
    bih = jax.random.uniform(ks[4], (1, 4 * H), jnp.float32, -lim_lstm, lim_lstm)
    bhh = jax.random.uniform(ks[5], (1, 4 * H), jnp.float32, -lim_lstm, lim_lstm)

    # self.h0 / self.c0 = torch.randn(1, 1, 4)  -> flattened to (1, 4)
    h0 = jax.random.normal(ks[6], (1, H), jnp.float32)
    c0 = jax.random.normal(ks[7], (1, H), jnp.float32)

    params = pack_params(wlin, blin, wih, whh, bih, bhh, h0, c0)

    # x[0][i] = 512-d backbone feature for step i (see TODO(synk) above)
    x = jax.random.normal(ks[8], (1, STEPS, FEAT), jnp.float32)

    out = mymodel_forward(x, params)
    out = jax.block_until_ready(out)

    ref = ref_forward(x, wlin, blin, wih, whh, bih, bhh, h0, c0)
    assert out.shape == (1, 4)
    np.testing.assert_allclose(np.asarray(out), np.asarray(ref), rtol=1e-5, atol=1e-5)
    print("KERNEL_OK")
</pallas_src>

<mosaic_0001>
module attributes {stable_mosaic.version = 11 : i64} {
  func.func @mymodel_kernel(%arg0: memref<19x512xf32, #tpu.memory_space<vmem>>, %arg1: memref<512x4xf32, #tpu.memory_space<vmem>>, %arg2: memref<16x16xf32, #tpu.memory_space<vmem>>, %arg3: memref<1x4xf32, #tpu.memory_space<vmem>>) attributes {dimension_semantics = [], scalar_prefetch = 0 : i64, scratch_operands = 0 : i64, tpu.core_type = #tpu.core_type<tc>} {
    %c0 = arith.constant 0 : index
    %c0_0 = arith.constant 0 : index
    %0 = vector.load %arg2[%c0, %c0_0] : memref<16x16xf32, #tpu.memory_space<vmem>>, vector<4x16xf32>
    %c4 = arith.constant 4 : index
    %c0_1 = arith.constant 0 : index
    %1 = vector.load %arg2[%c4, %c0_1] : memref<16x16xf32, #tpu.memory_space<vmem>>, vector<1x16xf32>
    %c5 = arith.constant 5 : index
    %c0_2 = arith.constant 0 : index
    %2 = vector.load %arg2[%c5, %c0_2] : memref<16x16xf32, #tpu.memory_space<vmem>>, vector<1x16xf32>
    %c6 = arith.constant 6 : index
    %c0_3 = arith.constant 0 : index
    %3 = vector.load %arg2[%c6, %c0_3] : memref<16x16xf32, #tpu.memory_space<vmem>>, vector<1x16xf32>
    %c7 = arith.constant 7 : index
    %c0_4 = arith.constant 0 : index
    %4 = vector.load %arg2[%c7, %c0_4] : memref<16x16xf32, #tpu.memory_space<vmem>>, vector<1x16xf32>
    %c8 = arith.constant 8 : index
    %c0_5 = arith.constant 0 : index
    %5 = vector.load %arg2[%c8, %c0_5] : memref<16x16xf32, #tpu.memory_space<vmem>>, vector<1x16xf32>
    %c9 = arith.constant 9 : index
    %c0_6 = arith.constant 0 : index
    %6 = vector.load %arg2[%c9, %c0_6] : memref<16x16xf32, #tpu.memory_space<vmem>>, vector<1x16xf32>
    %c10 = arith.constant 10 : index
    %c0_7 = arith.constant 0 : index
    %7 = vector.load %arg2[%c10, %c0_7] : memref<16x16xf32, #tpu.memory_space<vmem>>, vector<1x16xf32>
    %c11 = arith.constant 11 : index
    %c0_8 = arith.constant 0 : index
    %8 = vector.load %arg2[%c11, %c0_8] : memref<16x16xf32, #tpu.memory_space<vmem>>, vector<1x4xf32>
    %c12 = arith.constant 12 : index
    %c0_9 = arith.constant 0 : index
    %9 = vector.load %arg2[%c12, %c0_9] : memref<16x16xf32, #tpu.memory_space<vmem>>, vector<1x4xf32>
    %c13 = arith.constant 13 : index
    %c0_10 = arith.constant 0 : index
    %10 = vector.load %arg2[%c13, %c0_10] : memref<16x16xf32, #tpu.memory_space<vmem>>, vector<1x4xf32>
    %c0_11 = arith.constant 0 : index
    %c0_12 = arith.constant 0 : index
    %11 = vector.load %arg0[%c0_11, %c0_12] : memref<19x512xf32, #tpu.memory_space<vmem>>, vector<19x512xf32>
    %c0_13 = arith.constant 0 : index
    %c0_14 = arith.constant 0 : index
    %12 = vector.load %arg1[%c0_13, %c0_14] : memref<512x4xf32, #tpu.memory_space<vmem>>, vector<512x4xf32>
    %cst = arith.constant dense<0.000000e+00> : vector<19x4xf32>
    %13 = tpu.matmul %11, %12, %cst {dimension_numbers = #tpu.dot_dimension_numbers<[1], [0], [0], [1], [0, 0, 1, 1], [], []>} : vector<19x512xf32>, vector<512x4xf32>, vector<19x4xf32> -> vector<19x4xf32>
    %14 = vector.broadcast %8 : vector<1x4xf32> to vector<19x4xf32>
    %15 = arith.addf %13, %14 : vector<19x4xf32>
    %cst_15 = arith.constant dense<0xFF800000> : vector<19xf32>
    %16 = vector.multi_reduction <maximumf>, %15, %cst_15 [1] : vector<19x4xf32> to vector<19xf32>
    %17 = vector.shape_cast %16 : vector<19xf32> to vector<19x1xf32>
    %18 = vector.broadcast %17 : vector<19x1xf32> to vector<19x4xf32>
    %19 = arith.subf %15, %18 : vector<19x4xf32>
    %20 = math.exp %19 : vector<19x4xf32>
    %cst_16 = arith.constant dense<0.000000e+00> : vector<19xf32>
    %21 = vector.multi_reduction <add>, %20, %cst_16 [1] : vector<19x4xf32> to vector<19xf32>
    %22 = vector.shape_cast %21 : vector<19xf32> to vector<19x1xf32>
    %23 = vector.broadcast %22 : vector<19x1xf32> to vector<19x4xf32>
    %24 = arith.divf %20, %23 : vector<19x4xf32>
    %cst_17 = arith.constant dense<0.000000e+00> : vector<19x16xf32>
    %25 = tpu.matmul %24, %0, %cst_17 {dimension_numbers = #tpu.dot_dimension_numbers<[1], [0], [0], [1], [0, 0, 1, 1], [], []>} : vector<19x4xf32>, vector<4x16xf32>, vector<19x16xf32> -> vector<19x16xf32>
    %26 = vector.broadcast %5 : vector<1x16xf32> to vector<19x16xf32>
    %27 = arith.addf %25, %26 : vector<19x16xf32>
    %28 = vector.extract_strided_slice %27 {offsets = [0, 0], sizes = [1, 16], strides = [1, 1]} : vector<19x16xf32> to vector<1x16xf32>
    %29 = vector.extract_strided_slice %27 {offsets = [1, 0], sizes = [1, 16], strides = [1, 1]} : vector<19x16xf32> to vector<1x16xf32>
    %30 = vector.extract_strided_slice %27 {offsets = [2, 0], sizes = [1, 16], strides = [1, 1]} : vector<19x16xf32> to vector<1x16xf32>
    %31 = vector.extract_strided_slice %27 {offsets = [3, 0], sizes = [1, 16], strides = [1, 1]} : vector<19x16xf32> to vector<1x16xf32>
    %32 = vector.extract_strided_slice %27 {offsets = [4, 0], sizes = [1, 16], strides = [1, 1]} : vector<19x16xf32> to vector<1x16xf32>
    %33 = vector.extract_strided_slice %27 {offsets = [5, 0], sizes = [1, 16], strides = [1, 1]} : vector<19x16xf32> to vector<1x16xf32>
    %34 = vector.extract_strided_slice %27 {offsets = [6, 0], sizes = [1, 16], strides = [1, 1]} : vector<19x16xf32> to vector<1x16xf32>
    %35 = vector.extract_strided_slice %27 {offsets = [7, 0], sizes = [1, 16], strides = [1, 1]} : vector<19x16xf32> to vector<1x16xf32>
    %36 = vector.extract_strided_slice %27 {offsets = [8, 0], sizes = [1, 16], strides = [1, 1]} : vector<19x16xf32> to vector<1x16xf32>
    %37 = vector.extract_strided_slice %27 {offsets = [9, 0], sizes = [1, 16], strides = [1, 1]} : vector<19x16xf32> to vector<1x16xf32>
    %38 = vector.extract_strided_slice %27 {offsets = [10, 0], sizes = [1, 16], strides = [1, 1]} : vector<19x16xf32> to vector<1x16xf32>
    %39 = vector.extract_strided_slice %27 {offsets = [11, 0], sizes = [1, 16], strides = [1, 1]} : vector<19x16xf32> to vector<1x16xf32>
    %40 = vector.extract_strided_slice %27 {offsets = [12, 0], sizes = [1, 16], strides = [1, 1]} : vector<19x16xf32> to vector<1x16xf32>
    %41 = vector.extract_strided_slice %27 {offsets = [13, 0], sizes = [1, 16], strides = [1, 1]} : vector<19x16xf32> to vector<1x16xf32>
    %42 = vector.extract_strided_slice %27 {offsets = [14, 0], sizes = [1, 16], strides = [1, 1]} : vector<19x16xf32> to vector<1x16xf32>
    %43 = vector.extract_strided_slice %27 {offsets = [15, 0], sizes = [1, 16], strides = [1, 1]} : vector<19x16xf32> to vector<1x16xf32>
    %44 = vector.extract_strided_slice %27 {offsets = [16, 0], sizes = [1, 16], strides = [1, 1]} : vector<19x16xf32> to vector<1x16xf32>
    %45 = vector.extract_strided_slice %27 {offsets = [17, 0], sizes = [1, 16], strides = [1, 1]} : vector<19x16xf32> to vector<1x16xf32>
    %46 = vector.extract_strided_slice %27 {offsets = [18, 0], sizes = [1, 16], strides = [1, 1]} : vector<19x16xf32> to vector<1x16xf32>
    %47 = vector.extract_strided_slice %9 {offsets = [0, 0], sizes = [1, 1], strides = [1, 1]} : vector<1x4xf32> to vector<1x1xf32>
    %48 = vector.broadcast %47 : vector<1x1xf32> to vector<1x16xf32>
    %49 = arith.mulf %48, %1 : vector<1x16xf32>
    %50 = vector.extract_strided_slice %9 {offsets = [0, 1], sizes = [1, 1], strides = [1, 1]} : vector<1x4xf32> to vector<1x1xf32>
    %51 = vector.broadcast %50 : vector<1x1xf32> to vector<1x16xf32>
    %52 = arith.mulf %51, %2 : vector<1x16xf32>
    %53 = arith.addf %49, %52 : vector<1x16xf32>
    %54 = vector.extract_strided_slice %9 {offsets = [0, 2], sizes = [1, 1], strides = [1, 1]} : vector<1x4xf32> to vector<1x1xf32>
    %55 = vector.broadcast %54 : vector<1x1xf32> to vector<1x16xf32>
    %56 = arith.mulf %55, %3 : vector<1x16xf32>
    %57 = arith.addf %53, %56 : vector<1x16xf32>
    %58 = vector.extract_strided_slice %9 {offsets = [0, 3], sizes = [1, 1], strides = [1, 1]} : vector<1x4xf32> to vector<1x1xf32>
    %59 = vector.broadcast %58 : vector<1x1xf32> to vector<1x16xf32>
    %60 = arith.mulf %59, %4 : vector<1x16xf32>
    %61 = arith.addf %57, %60 : vector<1x16xf32>
    %62 = arith.addf %28, %61 : vector<1x16xf32>
    %63 = math.tanh %62 : vector<1x16xf32>
    %64 = arith.mulf %63, %6 : vector<1x16xf32>
    %65 = arith.addf %64, %7 : vector<1x16xf32>
    %66 = vector.extract_strided_slice %65 {offsets = [0, 0], sizes = [1, 4], strides = [1, 1]} : vector<1x16xf32> to vector<1x4xf32>
    %67 = vector.extract_strided_slice %65 {offsets = [0, 4], sizes = [1, 4], strides = [1, 1]} : vector<1x16xf32> to vector<1x4xf32>
    %68 = vector.extract_strided_slice %65 {offsets = [0, 8], sizes = [1, 4], strides = [1, 1]} : vector<1x16xf32> to vector<1x4xf32>
    %69 = vector.extract_strided_slice %65 {offsets = [0, 12], sizes = [1, 4], strides = [1, 1]} : vector<1x16xf32> to vector<1x4xf32>
    %70 = arith.mulf %67, %10 : vector<1x4xf32>
    %71 = arith.mulf %66, %68 : vector<1x4xf32>
    %72 = arith.addf %70, %71 : vector<1x4xf32>
    %73 = math.tanh %72 : vector<1x4xf32>
    %74 = arith.mulf %69, %73 : vector<1x4xf32>
    %75 = vector.extract_strided_slice %74 {offsets = [0, 0], sizes = [1, 1], strides = [1, 1]} : vector<1x4xf32> to vector<1x1xf32>
    %76 = vector.broadcast %75 : vector<1x1xf32> to vector<1x16xf32>
    %77 = arith.mulf %76, %1 : vector<1x16xf32>
    %78 = vector.extract_strided_slice %74 {offsets = [0, 1], sizes = [1, 1], strides = [1, 1]} : vector<1x4xf32> to vector<1x1xf32>
    %79 = vector.broadcast %78 : vector<1x1xf32> to vector<1x16xf32>
    %80 = arith.mulf %79, %2 : vector<1x16xf32>
    %81 = arith.addf %77, %80 : vector<1x16xf32>
    %82 = vector.extract_strided_slice %74 {offsets = [0, 2], sizes = [1, 1], strides = [1, 1]} : vector<1x4xf32> to vector<1x1xf32>
    %83 = vector.broadcast %82 : vector<1x1xf32> to vector<1x16xf32>
    %84 = arith.mulf %83, %3 : vector<1x16xf32>
    %85 = arith.addf %81, %84 : vector<1x16xf32>
    %86 = vector.extract_strided_slice %74 {offsets = [0, 3], sizes = [1, 1], strides = [1, 1]} : vector<1x4xf32> to vector<1x1xf32>
    %87 = vector.broadcast %86 : vector<1x1xf32> to vector<1x16xf32>
    %88 = arith.mulf %87, %4 : vector<1x16xf32>
    %89 = arith.addf %85, %88 : vector<1x16xf32>
    %90 = arith.addf %29, %89 : vector<1x16xf32>
    %91 = math.tanh %90 : vector<1x16xf32>
    %92 = arith.mulf %91, %6 : vector<1x16xf32>
    %93 = arith.addf %92, %7 : vector<1x16xf32>
    %94 = vector.extract_strided_slice %93 {offsets = [0, 0], sizes = [1, 4], strides = [1, 1]} : vector<1x16xf32> to vector<1x4xf32>
    %95 = vector.extract_strided_slice %93 {offsets = [0, 4], sizes = [1, 4], strides = [1, 1]} : vector<1x16xf32> to vector<1x4xf32>
    %96 = vector.extract_strided_slice %93 {offsets = [0, 8], sizes = [1, 4], strides = [1, 1]} : vector<1x16xf32> to vector<1x4xf32>
    %97 = vector.extract_strided_slice %93 {offsets = [0, 12], sizes = [1, 4], strides = [1, 1]} : vector<1x16xf32> to vector<1x4xf32>
    %98 = arith.mulf %95, %72 : vector<1x4xf32>
    %99 = arith.mulf %94, %96 : vector<1x4xf32>
    %100 = arith.addf %98, %99 : vector<1x4xf32>
    %101 = math.tanh %100 : vector<1x4xf32>
    %102 = arith.mulf %97, %101 : vector<1x4xf32>
    %103 = vector.extract_strided_slice %102 {offsets = [0, 0], sizes = [1, 1], strides = [1, 1]} : vector<1x4xf32> to vector<1x1xf32>
    %104 = vector.broadcast %103 : vector<1x1xf32> to vector<1x16xf32>
    %105 = arith.mulf %104, %1 : vector<1x16xf32>
    %106 = vector.extract_strided_slice %102 {offsets = [0, 1], sizes = [1, 1], strides = [1, 1]} : vector<1x4xf32> to vector<1x1xf32>
    %107 = vector.broadcast %106 : vector<1x1xf32> to vector<1x16xf32>
    %108 = arith.mulf %107, %2 : vector<1x16xf32>
    %109 = arith.addf %105, %108 : vector<1x16xf32>
    %110 = vector.extract_strided_slice %102 {offsets = [0, 2], sizes = [1, 1], strides = [1, 1]} : vector<1x4xf32> to vector<1x1xf32>
    %111 = vector.broadcast %110 : vector<1x1xf32> to vector<1x16xf32>
    %112 = arith.mulf %111, %3 : vector<1x16xf32>
    %113 = arith.addf %109, %112 : vector<1x16xf32>
    %114 = vector.extract_strided_slice %102 {offsets = [0, 3], sizes = [1, 1], strides = [1, 1]} : vector<1x4xf32> to vector<1x1xf32>
    %115 = vector.broadcast %114 : vector<1x1xf32> to vector<1x16xf32>
    %116 = arith.mulf %115, %4 : vector<1x16xf32>
    %117 = arith.addf %113, %116 : vector<1x16xf32>
    %118 = arith.addf %30, %117 : vector<1x16xf32>
    %119 = math.tanh %118 : vector<1x16xf32>
    %120 = arith.mulf %119, %6 : vector<1x16xf32>
    %121 = arith.addf %120, %7 : vector<1x16xf32>
    %122 = vector.extract_strided_slice %121 {offsets = [0, 0], sizes = [1, 4], strides = [1, 1]} : vector<1x16xf32> to vector<1x4xf32>
    %123 = vector.extract_strided_slice %121 {offsets = [0, 4], sizes = [1, 4], strides = [1, 1]} : vector<1x16xf32> to vector<1x4xf32>
    %124 = vector.extract_strided_slice %121 {offsets = [0, 8], sizes = [1, 4], strides = [1, 1]} : vector<1x16xf32> to vector<1x4xf32>
    %125 = vector.extract_strided_slice %121 {offsets = [0, 12], sizes = [1, 4], strides = [1, 1]} : vector<1x16xf32> to vector<1x4xf32>
    %126 = arith.mulf %123, %100 : vector<1x4xf32>
    %127 = arith.mulf %122, %124 : vector<1x4xf32>
    %128 = arith.addf %126, %127 : vector<1x4xf32>
    %129 = math.tanh %128 : vector<1x4xf32>
    %130 = arith.mulf %125, %129 : vector<1x4xf32>
    %131 = vector.extract_strided_slice %130 {offsets = [0, 0], sizes = [1, 1], strides = [1, 1]} : vector<1x4xf32> to vector<1x1xf32>
    %132 = vector.broadcast %131 : vector<1x1xf32> to vector<1x16xf32>
    %133 = arith.mulf %132, %1 : vector<1x16xf32>
    %134 = vector.extract_strided_slice %130 {offsets = [0, 1], sizes = [1, 1], strides = [1, 1]} : vector<1x4xf32> to vector<1x1xf32>
    %135 = vector.broadcast %134 : vector<1x1xf32> to vector<1x16xf32>
    %136 = arith.mulf %135, %2 : vector<1x16xf32>
    %137 = arith.addf %133, %136 : vector<1x16xf32>
    %138 = vector.extract_strided_slice %130 {offsets = [0, 2], sizes = [1, 1], strides = [1, 1]} : vector<1x4xf32> to vector<1x1xf32>
    %139 = vector.broadcast %138 : vector<1x1xf32> to vector<1x16xf32>
    %140 = arith.mulf %139, %3 : vector<1x16xf32>
    %141 = arith.addf %137, %140 : vector<1x16xf32>
    %142 = vector.extract_strided_slice %130 {offsets = [0, 3], sizes = [1, 1], strides = [1, 1]} : vector<1x4xf32> to vector<1x1xf32>
    %143 = vector.broadcast %142 : vector<1x1xf32> to vector<1x16xf32>
    %144 = arith.mulf %143, %4 : vector<1x16xf32>
    %145 = arith.addf %141, %144 : vector<1x16xf32>
    %146 = arith.addf %31, %145 : vector<1x16xf32>
    %147 = math.tanh %146 : vector<1x16xf32>
    %148 = arith.mulf %147, %6 : vector<1x16xf32>
    %149 = arith.addf %148, %7 : vector<1x16xf32>
    %150 = vector.extract_strided_slice %149 {offsets = [0, 0], sizes = [1, 4], strides = [1, 1]} : vector<1x16xf32> to vector<1x4xf32>
    %151 = vector.extract_strided_slice %149 {offsets = [0, 4], sizes = [1, 4], strides = [1, 1]} : vector<1x16xf32> to vector<1x4xf32>
    %152 = vector.extract_strided_slice %149 {offsets = [0, 8], sizes = [1, 4], strides = [1, 1]} : vector<1x16xf32> to vector<1x4xf32>
    %153 = vector.extract_strided_slice %149 {offsets = [0, 12], sizes = [1, 4], strides = [1, 1]} : vector<1x16xf32> to vector<1x4xf32>
    %154 = arith.mulf %151, %128 : vector<1x4xf32>
    %155 = arith.mulf %150, %152 : vector<1x4xf32>
    %156 = arith.addf %154, %155 : vector<1x4xf32>
    %157 = math.tanh %156 : vector<1x4xf32>
    %158 = arith.mulf %153, %157 : vector<1x4xf32>
    %159 = vector.extract_strided_slice %158 {offsets = [0, 0], sizes = [1, 1], strides = [1, 1]} : vector<1x4xf32> to vector<1x1xf32>
    %160 = vector.broadcast %159 : vector<1x1xf32> to vector<1x16xf32>
    %161 = arith.mulf %160, %1 : vector<1x16xf32>
    %162 = vector.extract_strided_slice %158 {offsets = [0, 1], sizes = [1, 1], strides = [1, 1]} : vector<1x4xf32> to vector<1x1xf32>
    %163 = vector.broadcast %162 : vector<1x1xf32> to vector<1x16xf32>
    %164 = arith.mulf %163, %2 : vector<1x16xf32>
    %165 = arith.addf %161, %164 : vector<1x16xf32>
    %166 = vector.extract_strided_slice %158 {offsets = [0, 2], sizes = [1, 1], strides = [1, 1]} : vector<1x4xf32> to vector<1x1xf32>
    %167 = vector.broadcast %166 : vector<1x1xf32> to vector<1x16xf32>
    %168 = arith.mulf %167, %3 : vector<1x16xf32>
    %169 = arith.addf %165, %168 : vector<1x16xf32>
    %170 = vector.extract_strided_slice %158 {offsets = [0, 3], sizes = [1, 1], strides = [1, 1]} : vector<1x4xf32> to vector<1x1xf32>
    %171 = vector.broadcast %170 : vector<1x1xf32> to vector<1x16xf32>
    %172 = arith.mulf %171, %4 : vector<1x16xf32>
    %173 = arith.addf %169, %172 : vector<1x16xf32>
    %174 = arith.addf %32, %173 : vector<1x16xf32>
    %175 = math.tanh %174 : vector<1x16xf32>
    %176 = arith.mulf %175, %6 : vector<1x16xf32>
    %177 = arith.addf %176, %7 : vector<1x16xf32>
    %178 = vector.extract_strided_slice %177 {offsets = [0, 0], sizes = [1, 4], strides = [1, 1]} : vector<1x16xf32> to vector<1x4xf32>
    %179 = vector.extract_strided_slice %177 {offsets = [0, 4], sizes = [1, 4], strides = [1, 1]} : vector<1x16xf32> to vector<1x4xf32>
    %180 = vector.extract_strided_slice %177 {offsets = [0, 8], sizes = [1, 4], strides = [1, 1]} : vector<1x16xf32> to vector<1x4xf32>
    %181 = vector.extract_strided_slice %177 {offsets = [0, 12], sizes = [1, 4], strides = [1, 1]} : vector<1x16xf32> to vector<1x4xf32>
    %182 = arith.mulf %179, %156 : vector<1x4xf32>
    %183 = arith.mulf %178, %180 : vector<1x4xf32>
    %184 = arith.addf %182, %183 : vector<1x4xf32>
    %185 = math.tanh %184 : vector<1x4xf32>
    %186 = arith.mulf %181, %185 : vector<1x4xf32>
    %187 = vector.extract_strided_slice %186 {offsets = [0, 0], sizes = [1, 1], strides = [1, 1]} : vector<1x4xf32> to vector<1x1xf32>
    %188 = vector.broadcast %187 : vector<1x1xf32> to vector<1x16xf32>
    %189 = arith.mulf %188, %1 : vector<1x16xf32>
    %190 = vector.extract_strided_slice %186 {offsets = [0, 1], sizes = [1, 1], strides = [1, 1]} : vector<1x4xf32> to vector<1x1xf32>
    %191 = vector.broadcast %190 : vector<1x1xf32> to vector<1x16xf32>
    %192 = arith.mulf %191, %2 : vector<1x16xf32>
    %193 = arith.addf %189, %192 : vector<1x16xf32>
    %194 = vector.extract_strided_slice %186 {offsets = [0, 2], sizes = [1, 1], strides = [1, 1]} : vector<1x4xf32> to vector<1x1xf32>
    %195 = vector.broadcast %194 : vector<1x1xf32> to vector<1x16xf32>
    %196 = arith.mulf %195, %3 : vector<1x16xf32>
    %197 = arith.addf %193, %196 : vector<1x16xf32>
    %198 = vector.extract_strided_slice %186 {offsets = [0, 3], sizes = [1, 1], strides = [1, 1]} : vector<1x4xf32> to vector<1x1xf32>
    %199 = vector.broadcast %198 : vector<1x1xf32> to vector<1x16xf32>
    %200 = arith.mulf %199, %4 : vector<1x16xf32>
    %201 = arith.addf %197, %200 : vector<1x16xf32>
    %202 = arith.addf %33, %201 : vector<1x16xf32>
    %203 = math.tanh %202 : vector<1x16xf32>
    %204 = arith.mulf %203, %6 : vector<1x16xf32>
    %205 = arith.addf %204, %7 : vector<1x16xf32>
    %206 = vector.extract_strided_slice %205 {offsets = [0, 0], sizes = [1, 4], strides = [1, 1]} : vector<1x16xf32> to vector<1x4xf32>
    %207 = vector.extract_strided_slice %205 {offsets = [0, 4], sizes = [1, 4], strides = [1, 1]} : vector<1x16xf32> to vector<1x4xf32>
    %208 = vector.extract_strided_slice %205 {offsets = [0, 8], sizes = [1, 4], strides = [1, 1]} : vector<1x16xf32> to vector<1x4xf32>
    %209 = vector.extract_strided_slice %205 {offsets = [0, 12], sizes = [1, 4], strides = [1, 1]} : vector<1x16xf32> to vector<1x4xf32>
    %210 = arith.mulf %207, %184 : vector<1x4xf32>
    %211 = arith.mulf %206, %208 : vector<1x4xf32>
    %212 = arith.addf %210, %211 : vector<1x4xf32>
    %213 = math.tanh %212 : vector<1x4xf32>
    %214 = arith.mulf %209, %213 : vector<1x4xf32>
    %215 = vector.extract_strided_slice %214 {offsets = [0, 0], sizes = [1, 1], strides = [1, 1]} : vector<1x4xf32> to vector<1x1xf32>
    %216 = vector.broadcast %215 : vector<1x1xf32> to vector<1x16xf32>
    %217 = arith.mulf %216, %1 : vector<1x16xf32>
    %218 = vector.extract_strided_slice %214 {offsets = [0, 1], sizes = [1, 1], strides = [1, 1]} : vector<1x4xf32> to vector<1x1xf32>
    %219 = vector.broadcast %218 : vector<1x1xf32> to vector<1x16xf32>
    %220 = arith.mulf %219, %2 : vector<1x16xf32>
    %221 = arith.addf %217, %220 : vector<1x16xf32>
    %222 = vector.extract_strided_slice %214 {offsets = [0, 2], sizes = [1, 1], strides = [1, 1]} : vector<1x4xf32> to vector<1x1xf32>
    %223 = vector.broadcast %222 : vector<1x1xf32> to vector<1x16xf32>
    %224 = arith.mulf %223, %3 : vector<1x16xf32>
    %225 = arith.addf %221, %224 : vector<1x16xf32>
    %226 = vector.extract_strided_slice %214 {offsets = [0, 3], sizes = [1, 1], strides = [1, 1]} : vector<1x4xf32> to vector<1x1xf32>
    %227 = vector.broadcast %226 : vector<1x1xf32> to vector<1x16xf32>
    %228 = arith.mulf %227, %4 : vector<1x16xf32>
    %229 = arith.addf %225, %228 : vector<1x16xf32>
    %230 = arith.addf %34, %229 : vector<1x16xf32>
    %231 = math.tanh %230 : vector<1x16xf32>
    %232 = arith.mulf %231, %6 : vector<1x16xf32>
    %233 = arith.addf %232, %7 : vector<1x16xf32>
    %234 = vector.extract_strided_slice %233 {offsets = [0, 0], sizes = [1, 4], strides = [1, 1]} : vector<1x16xf32> to vector<1x4xf32>
    %235 = vector.extract_strided_slice %233 {offsets = [0, 4], sizes = [1, 4], strides = [1, 1]} : vector<1x16xf32> to vector<1x4xf32>
    %236 = vector.extract_strided_slice %233 {offsets = [0, 8], sizes = [1, 4], strides = [1, 1]} : vector<1x16xf32> to vector<1x4xf32>
    %237 = vector.extract_strided_slice %233 {offsets = [0, 12], sizes = [1, 4], strides = [1, 1]} : vector<1x16xf32> to vector<1x4xf32>
    %238 = arith.mulf %235, %212 : vector<1x4xf32>
    %239 = arith.mulf %234, %236 : vector<1x4xf32>
    %240 = arith.addf %238, %239 : vector<1x4xf32>
    %241 = math.tanh %240 : vector<1x4xf32>
    %242 = arith.mulf %237, %241 : vector<1x4xf32>
    %243 = vector.extract_strided_slice %242 {offsets = [0, 0], sizes = [1, 1], strides = [1, 1]} : vector<1x4xf32> to vector<1x1xf32>
    %244 = vector.broadcast %243 : vector<1x1xf32> to vector<1x16xf32>
    %245 = arith.mulf %244, %1 : vector<1x16xf32>
    %246 = vector.extract_strided_slice %242 {offsets = [0, 1], sizes = [1, 1], strides = [1, 1]} : vector<1x4xf32> to vector<1x1xf32>
    %247 = vector.broadcast %246 : vector<1x1xf32> to vector<1x16xf32>
    %248 = arith.mulf %247, %2 : vector<1x16xf32>
    %249 = arith.addf %245, %248 : vector<1x16xf32>
    %250 = vector.extract_strided_slice %242 {offsets = [0, 2], sizes = [1, 1], strides = [1, 1]} : vector<1x4xf32> to vector<1x1xf32>
    %251 = vector.broadcast %250 : vector<1x1xf32> to vector<1x16xf32>
    %252 = arith.mulf %251, %3 : vector<1x16xf32>
    %253 = arith.addf %249, %252 : vector<1x16xf32>
    %254 = vector.extract_strided_slice %242 {offsets = [0, 3], sizes = [1, 1], strides = [1, 1]} : vector<1x4xf32> to vector<1x1xf32>
    %255 = vector.broadcast %254 : vector<1x1xf32> to vector<1x16xf32>
    %256 = arith.mulf %255, %4 : vector<1x16xf32>
    %257 = arith.addf %253, %256 : vector<1x16xf32>
    %258 = arith.addf %35, %257 : vector<1x16xf32>
    %259 = math.tanh %258 : vector<1x16xf32>
    %260 = arith.mulf %259, %6 : vector<1x16xf32>
    %261 = arith.addf %260, %7 : vector<1x16xf32>
    %262 = vector.extract_strided_slice %261 {offsets = [0, 0], sizes = [1, 4], strides = [1, 1]} : vector<1x16xf32> to vector<1x4xf32>
    %263 = vector.extract_strided_slice %261 {offsets = [0, 4], sizes = [1, 4], strides = [1, 1]} : vector<1x16xf32> to vector<1x4xf32>
    %264 = vector.extract_strided_slice %261 {offsets = [0, 8], sizes = [1, 4], strides = [1, 1]} : vector<1x16xf32> to vector<1x4xf32>
    %265 = vector.extract_strided_slice %261 {offsets = [0, 12], sizes = [1, 4], strides = [1, 1]} : vector<1x16xf32> to vector<1x4xf32>
    %266 = arith.mulf %263, %240 : vector<1x4xf32>
    %267 = arith.mulf %262, %264 : vector<1x4xf32>
    %268 = arith.addf %266, %267 : vector<1x4xf32>
    %269 = math.tanh %268 : vector<1x4xf32>
    %270 = arith.mulf %265, %269 : vector<1x4xf32>
    %271 = vector.extract_strided_slice %270 {offsets = [0, 0], sizes = [1, 1], strides = [1, 1]} : vector<1x4xf32> to vector<1x1xf32>
    %272 = vector.broadcast %271 : vector<1x1xf32> to vector<1x16xf32>
    %273 = arith.mulf %272, %1 : vector<1x16xf32>
    %274 = vector.extract_strided_slice %270 {offsets = [0, 1], sizes = [1, 1], strides = [1, 1]} : vector<1x4xf32> to vector<1x1xf32>
    %275 = vector.broadcast %274 : vector<1x1xf32> to vector<1x16xf32>
    %276 = arith.mulf %275, %2 : vector<1x16xf32>
    %277 = arith.addf %273, %276 : vector<1x16xf32>
    %278 = vector.extract_strided_slice %270 {offsets = [0, 2], sizes = [1, 1], strides = [1, 1]} : vector<1x4xf32> to vector<1x1xf32>
    %279 = vector.broadcast %278 : vector<1x1xf32> to vector<1x16xf32>
    %280 = arith.mulf %279, %3 : vector<1x16xf32>
    %281 = arith.addf %277, %280 : vector<1x16xf32>
    %282 = vector.extract_strided_slice %270 {offsets = [0, 3], sizes = [1, 1], strides = [1, 1]} : vector<1x4xf32> to vector<1x1xf32>
    %283 = vector.broadcast %282 : vector<1x1xf32> to vector<1x16xf32>
    %284 = arith.mulf %283, %4 : vector<1x16xf32>
    %285 = arith.addf %281, %284 : vector<1x16xf32>
    %286 = arith.addf %36, %285 : vector<1x16xf32>
    %287 = math.tanh %286 : vector<1x16xf32>
    %288 = arith.mulf %287, %6 : vector<1x16xf32>
    %289 = arith.addf %288, %7 : vector<1x16xf32>
    %290 = vector.extract_strided_slice %289 {offsets = [0, 0], sizes = [1, 4], strides = [1, 1]} : vector<1x16xf32> to vector<1x4xf32>
    %291 = vector.extract_strided_slice %289 {offsets = [0, 4], sizes = [1, 4], strides = [1, 1]} : vector<1x16xf32> to vector<1x4xf32>
    %292 = vector.extract_strided_slice %289 {offsets = [0, 8], sizes = [1, 4], strides = [1, 1]} : vector<1x16xf32> to vector<1x4xf32>
    %293 = vector.extract_strided_slice %289 {offsets = [0, 12], sizes = [1, 4], strides = [1, 1]} : vector<1x16xf32> to vector<1x4xf32>
    %294 = arith.mulf %291, %268 : vector<1x4xf32>
    %295 = arith.mulf %290, %292 : vector<1x4xf32>
    %296 = arith.addf %294, %295 : vector<1x4xf32>
    %297 = math.tanh %296 : vector<1x4xf32>
    %298 = arith.mulf %293, %297 : vector<1x4xf32>
    %299 = vector.extract_strided_slice %298 {offsets = [0, 0], sizes = [1, 1], strides = [1, 1]} : vector<1x4xf32> to vector<1x1xf32>
    %300 = vector.broadcast %299 : vector<1x1xf32> to vector<1x16xf32>
    %301 = arith.mulf %300, %1 : vector<1x16xf32>
    %302 = vector.extract_strided_slice %298 {offsets = [0, 1], sizes = [1, 1], strides = [1, 1]} : vector<1x4xf32> to vector<1x1xf32>
    %303 = vector.broadcast %302 : vector<1x1xf32> to vector<1x16xf32>
    %304 = arith.mulf %303, %2 : vector<1x16xf32>
    %305 = arith.addf %301, %304 : vector<1x16xf32>
    %306 = vector.extract_strided_slice %298 {offsets = [0, 2], sizes = [1, 1], strides = [1, 1]} : vector<1x4xf32> to vector<1x1xf32>
    %307 = vector.broadcast %306 : vector<1x1xf32> to vector<1x16xf32>
    %308 = arith.mulf %307, %3 : vector<1x16xf32>
    %309 = arith.addf %305, %308 : vector<1x16xf32>
    %310 = vector.extract_strided_slice %298 {offsets = [0, 3], sizes = [1, 1], strides = [1, 1]} : vector<1x4xf32> to vector<1x1xf32>
    %311 = vector.broadcast %310 : vector<1x1xf32> to vector<1x16xf32>
    %312 = arith.mulf %311, %4 : vector<1x16xf32>
    %313 = arith.addf %309, %312 : vector<1x16xf32>
    %314 = arith.addf %37, %313 : vector<1x16xf32>
    %315 = math.tanh %314 : vector<1x16xf32>
    %316 = arith.mulf %315, %6 : vector<1x16xf32>
    %317 = arith.addf %316, %7 : vector<1x16xf32>
    %318 = vector.extract_strided_slice %317 {offsets = [0, 0], sizes = [1, 4], strides = [1, 1]} : vector<1x16xf32> to vector<1x4xf32>
    %319 = vector.extract_strided_slice %317 {offsets = [0, 4], sizes = [1, 4], strides = [1, 1]} : vector<1x16xf32> to vector<1x4xf32>
    %320 = vector.extract_strided_slice %317 {offsets = [0, 8], sizes = [1, 4], strides = [1, 1]} : vector<1x16xf32> to vector<1x4xf32>
    %321 = vector.extract_strided_slice %317 {offsets = [0, 12], sizes = [1, 4], strides = [1, 1]} : vector<1x16xf32> to vector<1x4xf32>
    %322 = arith.mulf %319, %296 : vector<1x4xf32>
    %323 = arith.mulf %318, %320 : vector<1x4xf32>
    %324 = arith.addf %322, %323 : vector<1x4xf32>
    %325 = math.tanh %324 : vector<1x4xf32>
    %326 = arith.mulf %321, %325 : vector<1x4xf32>
    %327 = vector.extract_strided_slice %326 {offsets = [0, 0], sizes = [1, 1], strides = [1, 1]} : vector<1x4xf32> to vector<1x1xf32>
    %328 = vector.broadcast %327 : vector<1x1xf32> to vector<1x16xf32>
    %329 = arith.mulf %328, %1 : vector<1x16xf32>
    %330 = vector.extract_strided_slice %326 {offsets = [0, 1], sizes = [1, 1], strides = [1, 1]} : vector<1x4xf32> to vector<1x1xf32>
    %331 = vector.broadcast %330 : vector<1x1xf32> to vector<1x16xf32>
    %332 = arith.mulf %331, %2 : vector<1x16xf32>
    %333 = arith.addf %329, %332 : vector<1x16xf32>
    %334 = vector.extract_strided_slice %326 {offsets = [0, 2], sizes = [1, 1], strides = [1, 1]} : vector<1x4xf32> to vector<1x1xf32>
    %335 = vector.broadcast %334 : vector<1x1xf32> to vector<1x16xf32>
    %336 = arith.mulf %335, %3 : vector<1x16xf32>
    %337 = arith.addf %333, %336 : vector<1x16xf32>
    %338 = vector.extract_strided_slice %326 {offsets = [0, 3], sizes = [1, 1], strides = [1, 1]} : vector<1x4xf32> to vector<1x1xf32>
    %339 = vector.broadcast %338 : vector<1x1xf32> to vector<1x16xf32>
    %340 = arith.mulf %339, %4 : vector<1x16xf32>
    %341 = arith.addf %337, %340 : vector<1x16xf32>
    %342 = arith.addf %38, %341 : vector<1x16xf32>
    %343 = math.tanh %342 : vector<1x16xf32>
    %344 = arith.mulf %343, %6 : vector<1x16xf32>
    %345 = arith.addf %344, %7 : vector<1x16xf32>
    %346 = vector.extract_strided_slice %345 {offsets = [0, 0], sizes = [1, 4], strides = [1, 1]} : vector<1x16xf32> to vector<1x4xf32>
    %347 = vector.extract_strided_slice %345 {offsets = [0, 4], sizes = [1, 4], strides = [1, 1]} : vector<1x16xf32> to vector<1x4xf32>
    %348 = vector.extract_strided_slice %345 {offsets = [0, 8], sizes = [1, 4], strides = [1, 1]} : vector<1x16xf32> to vector<1x4xf32>
    %349 = vector.extract_strided_slice %345 {offsets = [0, 12], sizes = [1, 4], strides = [1, 1]} : vector<1x16xf32> to vector<1x4xf32>
    %350 = arith.mulf %347, %324 : vector<1x4xf32>
    %351 = arith.mulf %346, %348 : vector<1x4xf32>
    %352 = arith.addf %350, %351 : vector<1x4xf32>
    %353 = math.tanh %352 : vector<1x4xf32>
    %354 = arith.mulf %349, %353 : vector<1x4xf32>
    %355 = vector.extract_strided_slice %354 {offsets = [0, 0], sizes = [1, 1], strides = [1, 1]} : vector<1x4xf32> to vector<1x1xf32>
    %356 = vector.broadcast %355 : vector<1x1xf32> to vector<1x16xf32>
    %357 = arith.mulf %356, %1 : vector<1x16xf32>
    %358 = vector.extract_strided_slice %354 {offsets = [0, 1], sizes = [1, 1], strides = [1, 1]} : vector<1x4xf32> to vector<1x1xf32>
    %359 = vector.broadcast %358 : vector<1x1xf32> to vector<1x16xf32>
    %360 = arith.mulf %359, %2 : vector<1x16xf32>
    %361 = arith.addf %357, %360 : vector<1x16xf32>
    %362 = vector.extract_strided_slice %354 {offsets = [0, 2], sizes = [1, 1], strides = [1, 1]} : vector<1x4xf32> to vector<1x1xf32>
    %363 = vector.broadcast %362 : vector<1x1xf32> to vector<1x16xf32>
    %364 = arith.mulf %363, %3 : vector<1x16xf32>
    %365 = arith.addf %361, %364 : vector<1x16xf32>
    %366 = vector.extract_strided_slice %354 {offsets = [0, 3], sizes = [1, 1], strides = [1, 1]} : vector<1x4xf32> to vector<1x1xf32>
    %367 = vector.broadcast %366 : vector<1x1xf32> to vector<1x16xf32>
    %368 = arith.mulf %367, %4 : vector<1x16xf32>
    %369 = arith.addf %365, %368 : vector<1x16xf32>
    %370 = arith.addf %39, %369 : vector<1x16xf32>
    %371 = math.tanh %370 : vector<1x16xf32>
    %372 = arith.mulf %371, %6 : vector<1x16xf32>
    %373 = arith.addf %372, %7 : vector<1x16xf32>
    %374 = vector.extract_strided_slice %373 {offsets = [0, 0], sizes = [1, 4], strides = [1, 1]} : vector<1x16xf32> to vector<1x4xf32>
    %375 = vector.extract_strided_slice %373 {offsets = [0, 4], sizes = [1, 4], strides = [1, 1]} : vector<1x16xf32> to vector<1x4xf32>
    %376 = vector.extract_strided_slice %373 {offsets = [0, 8], sizes = [1, 4], strides = [1, 1]} : vector<1x16xf32> to vector<1x4xf32>
    %377 = vector.extract_strided_slice %373 {offsets = [0, 12], sizes = [1, 4], strides = [1, 1]} : vector<1x16xf32> to vector<1x4xf32>
    %378 = arith.mulf %375, %352 : vector<1x4xf32>
    %379 = arith.mulf %374, %376 : vector<1x4xf32>
    %380 = arith.addf %378, %379 : vector<1x4xf32>
    %381 = math.tanh %380 : vector<1x4xf32>
    %382 = arith.mulf %377, %381 : vector<1x4xf32>
    %383 = vector.extract_strided_slice %382 {offsets = [0, 0], sizes = [1, 1], strides = [1, 1]} : vector<1x4xf32> to vector<1x1xf32>
    %384 = vector.broadcast %383 : vector<1x1xf32> to vector<1x16xf32>
    %385 = arith.mulf %384, %1 : vector<1x16xf32>
    %386 = vector.extract_strided_slice %382 {offsets = [0, 1], sizes = [1, 1], strides = [1, 1]} : vector<1x4xf32> to vector<1x1xf32>
    %387 = vector.broadcast %386 : vector<1x1xf32> to vector<1x16xf32>
    %388 = arith.mulf %387, %2 : vector<1x16xf32>
    %389 = arith.addf %385, %388 : vector<1x16xf32>
    %390 = vector.extract_strided_slice %382 {offsets = [0, 2], sizes = [1, 1], strides = [1, 1]} : vector<1x4xf32> to vector<1x1xf32>
    %391 = vector.broadcast %390 : vector<1x1xf32> to vector<1x16xf32>
    %392 = arith.mulf %391, %3 : vector<1x16xf32>
    %393 = arith.addf %389, %392 : vector<1x16xf32>
    %394 = vector.extract_strided_slice %382 {offsets = [0, 3], sizes = [1, 1], strides = [1, 1]} : vector<1x4xf32> to vector<1x1xf32>
    %395 = vector.broadcast %394 : vector<1x1xf32> to vector<1x16xf32>
    %396 = arith.mulf %395, %4 : vector<1x16xf32>
    %397 = arith.addf %393, %396 : vector<1x16xf32>
    %398 = arith.addf %40, %397 : vector<1x16xf32>
    %399 = math.tanh %398 : vector<1x16xf32>
    %400 = arith.mulf %399, %6 : vector<1x16xf32>
    %401 = arith.addf %400, %7 : vector<1x16xf32>
    %402 = vector.extract_strided_slice %401 {offsets = [0, 0], sizes = [1, 4], strides = [1, 1]} : vector<1x16xf32> to vector<1x4xf32>
    %403 = vector.extract_strided_slice %401 {offsets = [0, 4], sizes = [1, 4], strides = [1, 1]} : vector<1x16xf32> to vector<1x4xf32>
    %404 = vector.extract_strided_slice %401 {offsets = [0, 8], sizes = [1, 4], strides = [1, 1]} : vector<1x16xf32> to vector<1x4xf32>
    %405 = vector.extract_strided_slice %401 {offsets = [0, 12], sizes = [1, 4], strides = [1, 1]} : vector<1x16xf32> to vector<1x4xf32>
    %406 = arith.mulf %403, %380 : vector<1x4xf32>
    %407 = arith.mulf %402, %404 : vector<1x4xf32>
    %408 = arith.addf %406, %407 : vector<1x4xf32>
    %409 = math.tanh %408 : vector<1x4xf32>
    %410 = arith.mulf %405, %409 : vector<1x4xf32>
    %411 = vector.extract_strided_slice %410 {offsets = [0, 0], sizes = [1, 1], strides = [1, 1]} : vector<1x4xf32> to vector<1x1xf32>
    %412 = vector.broadcast %411 : vector<1x1xf32> to vector<1x16xf32>
    %413 = arith.mulf %412, %1 : vector<1x16xf32>
    %414 = vector.extract_strided_slice %410 {offsets = [0, 1], sizes = [1, 1], strides = [1, 1]} : vector<1x4xf32> to vector<1x1xf32>
    %415 = vector.broadcast %414 : vector<1x1xf32> to vector<1x16xf32>
    %416 = arith.mulf %415, %2 : vector<1x16xf32>
    %417 = arith.addf %413, %416 : vector<1x16xf32>
    %418 = vector.extract_strided_slice %410 {offsets = [0, 2], sizes = [1, 1], strides = [1, 1]} : vector<1x4xf32> to vector<1x1xf32>
    %419 = vector.broadcast %418 : vector<1x1xf32> to vector<1x16xf32>
    %420 = arith.mulf %419, %3 : vector<1x16xf32>
    %421 = arith.addf %417, %420 : vector<1x16xf32>
    %422 = vector.extract_strided_slice %410 {offsets = [0, 3], sizes = [1, 1], strides = [1, 1]} : vector<1x4xf32> to vector<1x1xf32>
    %423 = vector.broadcast %422 : vector<1x1xf32> to vector<1x16xf32>
    %424 = arith.mulf %423, %4 : vector<1x16xf32>
    %425 = arith.addf %421, %424 : vector<1x16xf32>
    %426 = arith.addf %41, %425 : vector<1x16xf32>
    %427 = math.tanh %426 : vector<1x16xf32>
    %428 = arith.mulf %427, %6 : vector<1x16xf32>
    %429 = arith.addf %428, %7 : vector<1x16xf32>
    %430 = vector.extract_strided_slice %429 {offsets = [0, 0], sizes = [1, 4], strides = [1, 1]} : vector<1x16xf32> to vector<1x4xf32>
    %431 = vector.extract_strided_slice %429 {offsets = [0, 4], sizes = [1, 4], strides = [1, 1]} : vector<1x16xf32> to vector<1x4xf32>
    %432 = vector.extract_strided_slice %429 {offsets = [0, 8], sizes = [1, 4], strides = [1, 1]} : vector<1x16xf32> to vector<1x4xf32>
    %433 = vector.extract_strided_slice %429 {offsets = [0, 12], sizes = [1, 4], strides = [1, 1]} : vector<1x16xf32> to vector<1x4xf32>
    %434 = arith.mulf %431, %408 : vector<1x4xf32>
    %435 = arith.mulf %430, %432 : vector<1x4xf32>
    %436 = arith.addf %434, %435 : vector<1x4xf32>
    %437 = math.tanh %436 : vector<1x4xf32>
    %438 = arith.mulf %433, %437 : vector<1x4xf32>
    %439 = vector.extract_strided_slice %438 {offsets = [0, 0], sizes = [1, 1], strides = [1, 1]} : vector<1x4xf32> to vector<1x1xf32>
    %440 = vector.broadcast %439 : vector<1x1xf32> to vector<1x16xf32>
    %441 = arith.mulf %440, %1 : vector<1x16xf32>
    %442 = vector.extract_strided_slice %438 {offsets = [0, 1], sizes = [1, 1], strides = [1, 1]} : vector<1x4xf32> to vector<1x1xf32>
    %443 = vector.broadcast %442 : vector<1x1xf32> to vector<1x16xf32>
    %444 = arith.mulf %443, %2 : vector<1x16xf32>
    %445 = arith.addf %441, %444 : vector<1x16xf32>
    %446 = vector.extract_strided_slice %438 {offsets = [0, 2], sizes = [1, 1], strides = [1, 1]} : vector<1x4xf32> to vector<1x1xf32>
    %447 = vector.broadcast %446 : vector<1x1xf32> to vector<1x16xf32>
    %448 = arith.mulf %447, %3 : vector<1x16xf32>
    %449 = arith.addf %445, %448 : vector<1x16xf32>
    %450 = vector.extract_strided_slice %438 {offsets = [0, 3], sizes = [1, 1], strides = [1, 1]} : vector<1x4xf32> to vector<1x1xf32>
    %451 = vector.broadcast %450 : vector<1x1xf32> to vector<1x16xf32>
    %452 = arith.mulf %451, %4 : vector<1x16xf32>
    %453 = arith.addf %449, %452 : vector<1x16xf32>
    %454 = arith.addf %42, %453 : vector<1x16xf32>
    %455 = math.tanh %454 : vector<1x16xf32>
    %456 = arith.mulf %455, %6 : vector<1x16xf32>
    %457 = arith.addf %456, %7 : vector<1x16xf32>
    %458 = vector.extract_strided_slice %457 {offsets = [0, 0], sizes = [1, 4], strides = [1, 1]} : vector<1x16xf32> to vector<1x4xf32>
    %459 = vector.extract_strided_slice %457 {offsets = [0, 4], sizes = [1, 4], strides = [1, 1]} : vector<1x16xf32> to vector<1x4xf32>
    %460 = vector.extract_strided_slice %457 {offsets = [0, 8], sizes = [1, 4], strides = [1, 1]} : vector<1x16xf32> to vector<1x4xf32>
    %461 = vector.extract_strided_slice %457 {offsets = [0, 12], sizes = [1, 4], strides = [1, 1]} : vector<1x16xf32> to vector<1x4xf32>
    %462 = arith.mulf %459, %436 : vector<1x4xf32>
    %463 = arith.mulf %458, %460 : vector<1x4xf32>
    %464 = arith.addf %462, %463 : vector<1x4xf32>
    %465 = math.tanh %464 : vector<1x4xf32>
    %466 = arith.mulf %461, %465 : vector<1x4xf32>
    %467 = vector.extract_strided_slice %466 {offsets = [0, 0], sizes = [1, 1], strides = [1, 1]} : vector<1x4xf32> to vector<1x1xf32>
    %468 = vector.broadcast %467 : vector<1x1xf32> to vector<1x16xf32>
    %469 = arith.mulf %468, %1 : vector<1x16xf32>
    %470 = vector.extract_strided_slice %466 {offsets = [0, 1], sizes = [1, 1], strides = [1, 1]} : vector<1x4xf32> to vector<1x1xf32>
    %471 = vector.broadcast %470 : vector<1x1xf32> to vector<1x16xf32>
    %472 = arith.mulf %471, %2 : vector<1x16xf32>
    %473 = arith.addf %469, %472 : vector<1x16xf32>
    %474 = vector.extract_strided_slice %466 {offsets = [0, 2], sizes = [1, 1], strides = [1, 1]} : vector<1x4xf32> to vector<1x1xf32>
    %475 = vector.broadcast %474 : vector<1x1xf32> to vector<1x16xf32>
    %476 = arith.mulf %475, %3 : vector<1x16xf32>
    %477 = arith.addf %473, %476 : vector<1x16xf32>
    %478 = vector.extract_strided_slice %466 {offsets = [0, 3], sizes = [1, 1], strides = [1, 1]} : vector<1x4xf32> to vector<1x1xf32>
    %479 = vector.broadcast %478 : vector<1x1xf32> to vector<1x16xf32>
    %480 = arith.mulf %479, %4 : vector<1x16xf32>
    %481 = arith.addf %477, %480 : vector<1x16xf32>
    %482 = arith.addf %43, %481 : vector<1x16xf32>
    %483 = math.tanh %482 : vector<1x16xf32>
    %484 = arith.mulf %483, %6 : vector<1x16xf32>
    %485 = arith.addf %484, %7 : vector<1x16xf32>
    %486 = vector.extract_strided_slice %485 {offsets = [0, 0], sizes = [1, 4], strides = [1, 1]} : vector<1x16xf32> to vector<1x4xf32>
    %487 = vector.extract_strided_slice %485 {offsets = [0, 4], sizes = [1, 4], strides = [1, 1]} : vector<1x16xf32> to vector<1x4xf32>
    %488 = vector.extract_strided_slice %485 {offsets = [0, 8], sizes = [1, 4], strides = [1, 1]} : vector<1x16xf32> to vector<1x4xf32>
    %489 = vector.extract_strided_slice %485 {offsets = [0, 12], sizes = [1, 4], strides = [1, 1]} : vector<1x16xf32> to vector<1x4xf32>
    %490 = arith.mulf %487, %464 : vector<1x4xf32>
    %491 = arith.mulf %486, %488 : vector<1x4xf32>
    %492 = arith.addf %490, %491 : vector<1x4xf32>
    %493 = math.tanh %492 : vector<1x4xf32>
    %494 = arith.mulf %489, %493 : vector<1x4xf32>
    %495 = vector.extract_strided_slice %494 {offsets = [0, 0], sizes = [1, 1], strides = [1, 1]} : vector<1x4xf32> to vector<1x1xf32>
    %496 = vector.broadcast %495 : vector<1x1xf32> to vector<1x16xf32>
    %497 = arith.mulf %496, %1 : vector<1x16xf32>
    %498 = vector.extract_strided_slice %494 {offsets = [0, 1], sizes = [1, 1], strides = [1, 1]} : vector<1x4xf32> to vector<1x1xf32>
    %499 = vector.broadcast %498 : vector<1x1xf32> to vector<1x16xf32>
    %500 = arith.mulf %499, %2 : vector<1x16xf32>
    %501 = arith.addf %497, %500 : vector<1x16xf32>
    %502 = vector.extract_strided_slice %494 {offsets = [0, 2], sizes = [1, 1], strides = [1, 1]} : vector<1x4xf32> to vector<1x1xf32>
    %503 = vector.broadcast %502 : vector<1x1xf32> to vector<1x16xf32>
    %504 = arith.mulf %503, %3 : vector<1x16xf32>
    %505 = arith.addf %501, %504 : vector<1x16xf32>
    %506 = vector.extract_strided_slice %494 {offsets = [0, 3], sizes = [1, 1], strides = [1, 1]} : vector<1x4xf32> to vector<1x1xf32>
    %507 = vector.broadcast %506 : vector<1x1xf32> to vector<1x16xf32>
    %508 = arith.mulf %507, %4 : vector<1x16xf32>
    %509 = arith.addf %505, %508 : vector<1x16xf32>
    %510 = arith.addf %44, %509 : vector<1x16xf32>
    %511 = math.tanh %510 : vector<1x16xf32>
    %512 = arith.mulf %511, %6 : vector<1x16xf32>
    %513 = arith.addf %512, %7 : vector<1x16xf32>
    %514 = vector.extract_strided_slice %513 {offsets = [0, 0], sizes = [1, 4], strides = [1, 1]} : vector<1x16xf32> to vector<1x4xf32>
    %515 = vector.extract_strided_slice %513 {offsets = [0, 4], sizes = [1, 4], strides = [1, 1]} : vector<1x16xf32> to vector<1x4xf32>
    %516 = vector.extract_strided_slice %513 {offsets = [0, 8], sizes = [1, 4], strides = [1, 1]} : vector<1x16xf32> to vector<1x4xf32>
    %517 = vector.extract_strided_slice %513 {offsets = [0, 12], sizes = [1, 4], strides = [1, 1]} : vector<1x16xf32> to vector<1x4xf32>
    %518 = arith.mulf %515, %492 : vector<1x4xf32>
    %519 = arith.mulf %514, %516 : vector<1x4xf32>
    %520 = arith.addf %518, %519 : vector<1x4xf32>
    %521 = math.tanh %520 : vector<1x4xf32>
    %522 = arith.mulf %517, %521 : vector<1x4xf32>
    %523 = vector.extract_strided_slice %522 {offsets = [0, 0], sizes = [1, 1], strides = [1, 1]} : vector<1x4xf32> to vector<1x1xf32>
    %524 = vector.broadcast %523 : vector<1x1xf32> to vector<1x16xf32>
    %525 = arith.mulf %524, %1 : vector<1x16xf32>
    %526 = vector.extract_strided_slice %522 {offsets = [0, 1], sizes = [1, 1], strides = [1, 1]} : vector<1x4xf32> to vector<1x1xf32>
    %527 = vector.broadcast %526 : vector<1x1xf32> to vector<1x16xf32>
    %528 = arith.mulf %527, %2 : vector<1x16xf32>
    %529 = arith.addf %525, %528 : vector<1x16xf32>
    %530 = vector.extract_strided_slice %522 {offsets = [0, 2], sizes = [1, 1], strides = [1, 1]} : vector<1x4xf32> to vector<1x1xf32>
    %531 = vector.broadcast %530 : vector<1x1xf32> to vector<1x16xf32>
    %532 = arith.mulf %531, %3 : vector<1x16xf32>
    %533 = arith.addf %529, %532 : vector<1x16xf32>
    %534 = vector.extract_strided_slice %522 {offsets = [0, 3], sizes = [1, 1], strides = [1, 1]} : vector<1x4xf32> to vector<1x1xf32>
    %535 = vector.broadcast %534 : vector<1x1xf32> to vector<1x16xf32>
    %536 = arith.mulf %535, %4 : vector<1x16xf32>
    %537 = arith.addf %533, %536 : vector<1x16xf32>
    %538 = arith.addf %45, %537 : vector<1x16xf32>
    %539 = math.tanh %538 : vector<1x16xf32>
    %540 = arith.mulf %539, %6 : vector<1x16xf32>
    %541 = arith.addf %540, %7 : vector<1x16xf32>
    %542 = vector.extract_strided_slice %541 {offsets = [0, 0], sizes = [1, 4], strides = [1, 1]} : vector<1x16xf32> to vector<1x4xf32>
    %543 = vector.extract_strided_slice %541 {offsets = [0, 4], sizes = [1, 4], strides = [1, 1]} : vector<1x16xf32> to vector<1x4xf32>
    %544 = vector.extract_strided_slice %541 {offsets = [0, 8], sizes = [1, 4], strides = [1, 1]} : vector<1x16xf32> to vector<1x4xf32>
    %545 = vector.extract_strided_slice %541 {offsets = [0, 12], sizes = [1, 4], strides = [1, 1]} : vector<1x16xf32> to vector<1x4xf32>
    %546 = arith.mulf %543, %520 : vector<1x4xf32>
    %547 = arith.mulf %542, %544 : vector<1x4xf32>
    %548 = arith.addf %546, %547 : vector<1x4xf32>
    %549 = math.tanh %548 : vector<1x4xf32>
    %550 = arith.mulf %545, %549 : vector<1x4xf32>
    %551 = vector.extract_strided_slice %550 {offsets = [0, 0], sizes = [1, 1], strides = [1, 1]} : vector<1x4xf32> to vector<1x1xf32>
    %552 = vector.broadcast %551 : vector<1x1xf32> to vector<1x16xf32>
    %553 = arith.mulf %552, %1 : vector<1x16xf32>
    %554 = vector.extract_strided_slice %550 {offsets = [0, 1], sizes = [1, 1], strides = [1, 1]} : vector<1x4xf32> to vector<1x1xf32>
    %555 = vector.broadcast %554 : vector<1x1xf32> to vector<1x16xf32>
    %556 = arith.mulf %555, %2 : vector<1x16xf32>
    %557 = arith.addf %553, %556 : vector<1x16xf32>
    %558 = vector.extract_strided_slice %550 {offsets = [0, 2], sizes = [1, 1], strides = [1, 1]} : vector<1x4xf32> to vector<1x1xf32>
    %559 = vector.broadcast %558 : vector<1x1xf32> to vector<1x16xf32>
    %560 = arith.mulf %559, %3 : vector<1x16xf32>
    %561 = arith.addf %557, %560 : vector<1x16xf32>
    %562 = vector.extract_strided_slice %550 {offsets = [0, 3], sizes = [1, 1], strides = [1, 1]} : vector<1x4xf32> to vector<1x1xf32>
    %563 = vector.broadcast %562 : vector<1x1xf32> to vector<1x16xf32>
    %564 = arith.mulf %563, %4 : vector<1x16xf32>
    %565 = arith.addf %561, %564 : vector<1x16xf32>
    %566 = arith.addf %46, %565 : vector<1x16xf32>
    %567 = math.tanh %566 : vector<1x16xf32>
    %568 = arith.mulf %567, %6 : vector<1x16xf32>
    %569 = arith.addf %568, %7 : vector<1x16xf32>
    %570 = vector.extract_strided_slice %569 {offsets = [0, 0], sizes = [1, 4], strides = [1, 1]} : vector<1x16xf32> to vector<1x4xf32>
    %571 = vector.extract_strided_slice %569 {offsets = [0, 4], sizes = [1, 4], strides = [1, 1]} : vector<1x16xf32> to vector<1x4xf32>
    %572 = vector.extract_strided_slice %569 {offsets = [0, 8], sizes = [1, 4], strides = [1, 1]} : vector<1x16xf32> to vector<1x4xf32>
    %573 = vector.extract_strided_slice %569 {offsets = [0, 12], sizes = [1, 4], strides = [1, 1]} : vector<1x16xf32> to vector<1x4xf32>
    %574 = arith.mulf %571, %548 : vector<1x4xf32>
    %575 = arith.mulf %570, %572 : vector<1x4xf32>
    %576 = arith.addf %574, %575 : vector<1x4xf32>
    %577 = math.tanh %576 : vector<1x4xf32>
    %578 = arith.mulf %573, %577 : vector<1x4xf32>
    %cst_18 = arith.constant dense<0xFF800000> : vector<1xf32>
    %579 = vector.multi_reduction <maximumf>, %578, %cst_18 [1] : vector<1x4xf32> to vector<1xf32>
    %580 = vector.shape_cast %579 : vector<1xf32> to vector<1x1xf32>
    %581 = vector.broadcast %580 : vector<1x1xf32> to vector<1x4xf32>
    %582 = arith.subf %578, %581 : vector<1x4xf32>
    %583 = math.exp %582 : vector<1x4xf32>
    %cst_19 = arith.constant dense<0.000000e+00> : vector<1xf32>
    %584 = vector.multi_reduction <add>, %583, %cst_19 [1] : vector<1x4xf32> to vector<1xf32>
    %585 = vector.shape_cast %584 : vector<1xf32> to vector<1x1xf32>
    %586 = vector.broadcast %585 : vector<1x1xf32> to vector<1x4xf32>
    %587 = arith.divf %583, %586 : vector<1x4xf32>
    %c0_20 = arith.constant 0 : index
    %c0_21 = arith.constant 0 : index
    %588 = vector.load %arg3[%c0_20, %c0_21] : memref<1x4xf32, #tpu.memory_space<vmem>>, vector<1x4xf32>
    tpu.vector_store %arg3[%c0_20, %c0_21], %587 {strides = array<i32>} : memref<1x4xf32, #tpu.memory_space<vmem>>, vector<1x4xf32>,
    return
  }
}

</mosaic_0001>

<llo_original>
// kernel: tpu_custom_call.1
$region0: #{tpu_custom_call.1}
  #allocation0 [shape = 'u32[]', space=smem, size = 0x4, offset = 0x4, fixed_abs, tag = 'smem constant byte address 0x4 - core index']
  #allocation1 [shape = 'u32[144,128]{1,0:T(1,128)}', space=vmem, size = 0x12000, scoped, tag = 'internal scratch']
  %s0 = inlined_call_operand.vmem [shape: f32[19,512], index: 0, kind: input, shape index: {}]
  %s1 = inlined_call_operand.vmem [shape: f32[512,4], index: 1, kind: input, shape index: {}]
  %s2 = inlined_call_operand.vmem [shape: f32[16,16], index: 2, kind: input, shape index: {}]
  %s3 = inlined_call_operand.hbm [shape: f32[1,4], index: 3, kind: output, shape index: {}]
  %s4 = sld [smem:[#allocation0]]
  $region22: #{tpu_custom_call.1} parent=0
    _
  %s6 = ssub.s32 1, %s4
  %s7 = scalar_select 0, %s6, %s4
  $region1: #{tpu_custom_call.1} parent=0
    #allocation2 [shape = 'u8[512]{0}', space=vmem, size = 0x400, scoped, tag = 'output window, operand 0, single buffered']
    #allocation3 [shape = 's32[1]{0}', space=sflag, size = 0x4, scoped, tag = 'scoped memory for tpu_custom_call.1']
    %8 = vsyncpa [#allocation3], 0
    // Predicated region
    $region2: #{tpu_custom_call.1} parent=1 // pred_check
      _
    $region3: #{tpu_custom_call.1} parent=1 // pred_check_branch
      %10 = sbr.rel (0) target = $region5
    $region4: #{tpu_custom_call.1} parent=1 // pred_region
      _
    $region5: #{tpu_custom_call.1} parent=1 // pred_fallthru
      _
    // Predicated region
    $region6: #{tpu_custom_call.1} parent=1 // pred_check
      _
    $region7: #{tpu_custom_call.1} parent=1 // pred_check_branch
      %12 = sbr.rel (0) target = $region9
    $region8: #{tpu_custom_call.1} parent=1 // pred_region
      _
    $region9: #{tpu_custom_call.1} parent=1 // pred_fallthru
      _
    // Predicated region
    $region10: #{tpu_custom_call.1} parent=1 // pred_check
      _
    $region11: #{tpu_custom_call.1} parent=1 // pred_check_branch
      %14 = sbr.rel (0) target = $region13
    $region12: #{tpu_custom_call.1} parent=1 // pred_region
      _
    $region13: #{tpu_custom_call.1} parent=1 // pred_fallthru
      _
    %v15 = vld [vmem:[%s2] sm:$0xf]
    %v16 = vld [vmem:[%s2 + $0x4] sm:$0x1]
    %v17 = vld [vmem:[%s2 + $0x5] sm:$0x1]
    %v18 = vld [vmem:[%s2 + $0x6] sm:$0x1]
    %v19 = vld [vmem:[%s2 + $0x7] sm:$0x1]
    %v20 = vld [vmem:[%s2 + $0x8] sm:$0x1]
    %v21 = vld [vmem:[%s2 + $0x9] sm:$0x1]
    %v22 = vld [vmem:[%s2 + $0xa] sm:$0x1]
    %v23 = vld [vmem:[%s2 + $0xb] sm:$0x1]
    %v24 = vld [vmem:[%s2 + $0xc] sm:$0x1]
    %v25 = vld [vmem:[%s2 + $0xd] sm:$0x1]
    %v26 = vld [vmem:[%s0] sm:$0xff]
    %v27 = vld [vmem:[%s0 + $0x8] sm:$0xff]
    %v28 = vld [vmem:[%s0 + $0x10] sm:$0xff]
    %v29 = vld [vmem:[%s0 + $0x18] sm:$0xff]
    %v30 = vld [vmem:[%s0 + $0x20] sm:$0xff]
    %v31 = vld [vmem:[%s0 + $0x28] sm:$0xff]
    %v32 = vld [vmem:[%s0 + $0x30] sm:$0xff]
    %v33 = vld [vmem:[%s0 + $0x38] sm:$0xff]
    %v34 = vld [vmem:[%s0 + $0x40] sm:$0x7]
    %v35 = vld [vmem:[%s0 + $0x48] sm:$0x7]
    %v36 = vld [vmem:[%s0 + $0x50] sm:$0x7]
    %v37 = vld [vmem:[%s0 + $0x58] sm:$0x7]
    %v38 = vld [vmem:[%s1] sm:$0xff]
    %v39 = vld [vmem:[%s1 + $0x8] sm:$0xff]
    %v40 = vld [vmem:[%s1 + $0x10] sm:$0xff]
    %v41 = vld [vmem:[%s1 + $0x18] sm:$0xff]
    %v42 = vld [vmem:[%s1 + $0x20] sm:$0xff]
    %v43 = vld [vmem:[%s1 + $0x28] sm:$0xff]
    %v44 = vld [vmem:[%s1 + $0x30] sm:$0xff]
    %v45 = vld [vmem:[%s1 + $0x38] sm:$0xff]
    %v46 = vld [vmem:[%s1 + $0x40] sm:$0xff]
    %v47 = vld [vmem:[%s1 + $0x48] sm:$0xff]
    %v48 = vld [vmem:[%s1 + $0x50] sm:$0xff]
    %v49 = vld [vmem:[%s1 + $0x58] sm:$0xff]
    %v50 = vld [vmem:[%s1 + $0x60] sm:$0xff]
    %v51 = vld [vmem:[%s1 + $0x68] sm:$0xff]
    %v52 = vld [vmem:[%s1 + $0x70] sm:$0xff]
    %v53 = vld [vmem:[%s1 + $0x78] sm:$0xff]
    %v54 = vld [vmem:[%s1 + $0x80] sm:$0xff]
    %v55 = vld [vmem:[%s1 + $0x88] sm:$0xff]
    %v56 = vld [vmem:[%s1 + $0x90] sm:$0xff]
    %v57 = vld [vmem:[%s1 + $0x98] sm:$0xff]
    %v58 = vld [vmem:[%s1 + $0xa0] sm:$0xff]
    %v59 = vld [vmem:[%s1 + $0xa8] sm:$0xff]
    %v60 = vld [vmem:[%s1 + $0xb0] sm:$0xff]
    %v61 = vld [vmem:[%s1 + $0xb8] sm:$0xff]
    %v62 = vld [vmem:[%s1 + $0xc0] sm:$0xff]
    %v63 = vld [vmem:[%s1 + $0xc8] sm:$0xff]
    %v64 = vld [vmem:[%s1 + $0xd0] sm:$0xff]
    %v65 = vld [vmem:[%s1 + $0xd8] sm:$0xff]
    %v66 = vld [vmem:[%s1 + $0xe0] sm:$0xff]
    %v67 = vld [vmem:[%s1 + $0xe8] sm:$0xff]
    %v68 = vld [vmem:[%s1 + $0xf0] sm:$0xff]
    %v69 = vld [vmem:[%s1 + $0xf8] sm:$0xff]
    %v70 = vld [vmem:[%s1 + $0x100] sm:$0xff]
    %v71 = vld [vmem:[%s1 + $0x108] sm:$0xff]
    %v72 = vld [vmem:[%s1 + $0x110] sm:$0xff]
    %v73 = vld [vmem:[%s1 + $0x118] sm:$0xff]
    %v74 = vld [vmem:[%s1 + $0x120] sm:$0xff]
    %v75 = vld [vmem:[%s1 + $0x128] sm:$0xff]
    %v76 = vld [vmem:[%s1 + $0x130] sm:$0xff]
    %v77 = vld [vmem:[%s1 + $0x138] sm:$0xff]
    %v78 = vld [vmem:[%s1 + $0x140] sm:$0xff]
    %v79 = vld [vmem:[%s1 + $0x148] sm:$0xff]
    %v80 = vld [vmem:[%s1 + $0x150] sm:$0xff]
    %v81 = vld [vmem:[%s1 + $0x158] sm:$0xff]
    %v82 = vld [vmem:[%s1 + $0x160] sm:$0xff]
    %v83 = vld [vmem:[%s1 + $0x168] sm:$0xff]
    %v84 = vld [vmem:[%s1 + $0x170] sm:$0xff]
    %v85 = vld [vmem:[%s1 + $0x178] sm:$0xff]
    %v86 = vld [vmem:[%s1 + $0x180] sm:$0xff]
    %v87 = vld [vmem:[%s1 + $0x188] sm:$0xff]
    %v88 = vld [vmem:[%s1 + $0x190] sm:$0xff]
    %v89 = vld [vmem:[%s1 + $0x198] sm:$0xff]
    %v90 = vld [vmem:[%s1 + $0x1a0] sm:$0xff]
    %v91 = vld [vmem:[%s1 + $0x1a8] sm:$0xff]
    %v92 = vld [vmem:[%s1 + $0x1b0] sm:$0xff]
    %v93 = vld [vmem:[%s1 + $0x1b8] sm:$0xff]
    %v94 = vld [vmem:[%s1 + $0x1c0] sm:$0xff]
    %v95 = vld [vmem:[%s1 + $0x1c8] sm:$0xff]
    %v96 = vld [vmem:[%s1 + $0x1d0] sm:$0xff]
    %v97 = vld [vmem:[%s1 + $0x1d8] sm:$0xff]
    %v98 = vld [vmem:[%s1 + $0x1e0] sm:$0xff]
    %v99 = vld [vmem:[%s1 + $0x1e8] sm:$0xff]
    %v100 = vld [vmem:[%s1 + $0x1f0] sm:$0xff]
    %v101 = vld [vmem:[%s1 + $0x1f8] sm:$0xff]
    %v102 = vlaneseq
    %v103 = vshrl.u32 %v102, 7
    %v104 = vsub.s32 0, %v103
    %v105 = vrot.slane %v23, %v104
    %106 = vmatprep.subr.mxu0 0.0
    %107 = vmatpush1.msra.mxu0 %v38
    %108 = vmatprep.subr.mxu0 0.0
    %109 = vmatpush1.msra.mxu0 %v39
    %110 = vmatprep.subr.mxu0 0.0
    %111 = vmatpush1.msra.mxu0 %v40
    %112 = vmatprep.subr.mxu0 0.0
    %113 = vmatpush1.msra.mxu0 %v41
    %114 = vmatprep.subr.mxu0 0.0
    %115 = vmatpush1.msra.mxu0 %v42
    %116 = vmatprep.subr.mxu0 0.0
    %117 = vmatpush1.msra.mxu0 %v43
    %118 = vmatprep.subr.mxu0 0.0
    %119 = vmatpush1.msra.mxu0 %v44
    %120 = vmatprep.subr.mxu0 0.0
    %121 = vmatpush1.msra.mxu0 %v45
    %122 = vmatprep.subr.mxu0 0.0
    %123 = vmatpush1.msra.mxu0 %v46
    %124 = vmatprep.subr.mxu0 0.0
    %125 = vmatpush1.msra.mxu0 %v47
    %126 = vmatprep.subr.mxu0 0.0
    %127 = vmatpush1.msra.mxu0 %v48
    %128 = vmatprep.subr.mxu0 0.0
    %129 = vmatpush1.msra.mxu0 %v49
    %130 = vmatprep.subr.mxu0 0.0
    %131 = vmatpush1.msra.mxu0 %v50
    %132 = vmatprep.subr.mxu0 0.0
    %133 = vmatpush1.msra.mxu0 %v51
    %134 = vmatprep.subr.mxu0 0.0
    %135 = vmatpush1.msra.mxu0 %v52
    %136 = vmatprep.subr.mxu0 0.0
    %137 = vmatpush1.msra.mxu0 %v53
    %138 = vmatprep.subr.mxu0 0.0
    %139 = vmatpush1.msra.mxu0 %v54
    %140 = vmatprep.subr.mxu0 0.0
    %141 = vmatpush1.msra.mxu0 %v55
    %142 = vmatprep.subr.mxu0 0.0
    %143 = vmatpush1.msra.mxu0 %v56
    %144 = vmatprep.subr.mxu0 0.0
    %145 = vmatpush1.msra.mxu0 %v57
    %146 = vmatprep.subr.mxu0 0.0
    %147 = vmatpush1.msra.mxu0 %v58
    %148 = vmatprep.subr.mxu0 0.0
    %149 = vmatpush1.msra.mxu0 %v59
    %150 = vmatprep.subr.mxu0 0.0
    %151 = vmatpush1.msra.mxu0 %v60
    %152 = vmatprep.subr.mxu0 0.0
    %153 = vmatpush1.msra.mxu0 %v61
    %154 = vmatprep.subr.mxu0 0.0
    %155 = vmatpush1.msra.mxu0 %v62
    %156 = vmatprep.subr.mxu0 0.0
    %157 = vmatpush1.msra.mxu0 %v63
    %158 = vmatprep.subr.mxu0 0.0
    %159 = vmatpush1.msra.mxu0 %v64
    %160 = vmatprep.subr.mxu0 0.0
    %161 = vmatpush1.msra.mxu0 %v65
    %162 = vmatprep.subr.mxu0 0.0
    %163 = vmatpush1.msra.mxu0 %v66
    %164 = vmatprep.subr.mxu0 0.0
    %165 = vmatpush1.msra.mxu0 %v67
    %166 = vmatprep.subr.mxu0 0.0
    %167 = vmatpush1.msra.mxu0 %v68
    %168 = vmatprep.subr.mxu0 0.0
    %169 = vmatpush1.msra.mxu0 %v69
    %170 = vmatprep.mubr.f32.mxu0 %v27
    %171 = vmatmul.mubr.f32.gmra.mrb[0].mxu0 %v26
    %v172 = vpop.f32.mrb[0].mxu0
    %v173 = vadd.f32 %v105, %v172
    %v174 = vpop.f32.mrb[0].mxu0
    %175 = vmatprep.mubr.f32.mxu0 %v31
    %176 = vmatmul.mubr.f32.gmra.mrb[0].mxu0 %v30
    %v177 = vpop.f32.mrb[0].mxu0
    %v178 = vadd.f32 %v105, %v177
    %v179 = vpop.f32.mrb[0].mxu0
    %180 = vmatprep.mubr.f32.mxu0 %v35
    %181 = vmatmul.mubr.f32.gmra.mrb[0].mxu0 %v34
    %v182 = vpop.f32.mrb[0].mxu0
    %v183 = vadd.f32 %v105, %v182
    %v184 = vpop.f32.mrb[0].mxu0
    %185 = vdwg.mxu0
    %186 = vmatprep.subr.mxu0 0.0
    %187 = vmatpush1.msra.mxu0 %v70
    %188 = vmatprep.subr.mxu0 0.0
    %189 = vmatpush1.msra.mxu0 %v71
    %190 = vmatprep.subr.mxu0 0.0
    %191 = vmatpush1.msra.mxu0 %v72
    %192 = vmatprep.subr.mxu0 0.0
    %193 = vmatpush1.msra.mxu0 %v73
    %194 = vmatprep.subr.mxu0 0.0
    %195 = vmatpush1.msra.mxu0 %v74
    %196 = vmatprep.subr.mxu0 0.0
    %197 = vmatpush1.msra.mxu0 %v75
    %198 = vmatprep.subr.mxu0 0.0
    %199 = vmatpush1.msra.mxu0 %v76
    %200 = vmatprep.subr.mxu0 0.0
    %201 = vmatpush1.msra.mxu0 %v77
    %202 = vmatprep.subr.mxu0 0.0
    %203 = vmatpush1.msra.mxu0 %v78
    %204 = vmatprep.subr.mxu0 0.0
    %205 = vmatpush1.msra.mxu0 %v79
    %206 = vmatprep.subr.mxu0 0.0
    %207 = vmatpush1.msra.mxu0 %v80
    %208 = vmatprep.subr.mxu0 0.0
    %209 = vmatpush1.msra.mxu0 %v81
    %210 = vmatprep.subr.mxu0 0.0
    %211 = vmatpush1.msra.mxu0 %v82
    %212 = vmatprep.subr.mxu0 0.0
    %213 = vmatpush1.msra.mxu0 %v83
    %214 = vmatprep.subr.mxu0 0.0
    %215 = vmatpush1.msra.mxu0 %v84
    %216 = vmatprep.subr.mxu0 0.0
    %217 = vmatpush1.msra.mxu0 %v85
    %218 = vmatprep.subr.mxu0 0.0
    %219 = vmatpush1.msra.mxu0 %v86
    %220 = vmatprep.subr.mxu0 0.0
    %221 = vmatpush1.msra.mxu0 %v87
    %222 = vmatprep.subr.mxu0 0.0
    %223 = vmatpush1.msra.mxu0 %v88
    %224 = vmatprep.subr.mxu0 0.0
    %225 = vmatpush1.msra.mxu0 %v89
    %226 = vmatprep.subr.mxu0 0.0
    %227 = vmatpush1.msra.mxu0 %v90
    %228 = vmatprep.subr.mxu0 0.0
    %229 = vmatpush1.msra.mxu0 %v91
    %230 = vmatprep.subr.mxu0 0.0
    %231 = vmatpush1.msra.mxu0 %v92
    %232 = vmatprep.subr.mxu0 0.0
    %233 = vmatpush1.msra.mxu0 %v93
    %234 = vmatprep.subr.mxu0 0.0
    %235 = vmatpush1.msra.mxu0 %v94
    %236 = vmatprep.subr.mxu0 0.0
    %237 = vmatpush1.msra.mxu0 %v95
    %238 = vmatprep.subr.mxu0 0.0
    %239 = vmatpush1.msra.mxu0 %v96
    %240 = vmatprep.subr.mxu0 0.0
    %241 = vmatpush1.msra.mxu0 %v97
    %242 = vmatprep.subr.mxu0 0.0
    %243 = vmatpush1.msra.mxu0 %v98
    %244 = vmatprep.subr.mxu0 0.0
    %245 = vmatpush1.msra.mxu0 %v99
    %246 = vmatprep.subr.mxu0 0.0
    %247 = vmatpush1.msra.mxu0 %v100
    %248 = vmatprep.subr.mxu0 0.0
    %249 = vmatpush1.msra.mxu0 %v101
    %250 = vmatprep.mubr.f32.mxu0 %v29
    %251 = vmatmul.mubr.f32.gmra.mrb[0].mxu0 %v28
    %v252 = vpop.f32.mrb[0].mxu0
    %v253 = vadd.f32 %v173, %v252
    %v254 = vpop.f32.mrb[0].mxu0
    %255 = vmatprep.mubr.f32.mxu0 %v33
    %256 = vmatmul.mubr.f32.gmra.mrb[0].mxu0 %v32
    %v257 = vpop.f32.mrb[0].mxu0
    %v258 = vadd.f32 %v178, %v257
    %v259 = vpop.f32.mrb[0].mxu0
    %260 = vmatprep.mubr.f32.mxu0 %v37
    %261 = vmatmul.mubr.f32.gmra.mrb[0].mxu0 %v36
    %v262 = vpop.f32.mrb[0].mxu0
    %v263 = vadd.f32 %v183, %v262
    %v264 = vpop.f32.mrb[0].mxu0
    %265 = vdwg.mxu0
    %vm266 = vcmask 31744
    %v267 = vsel %vm266, %v253, -inf
    %268 = vmax.xlane.f32.xlu0 %v267
    %v269 = vpop.xlane.xlu0 %268
    %v270 = vsel %vm266, %v258, -inf
    %271 = vmax.xlane.f32.xlu0 %v270
    %v272 = vpop.xlane.xlu0 %271
    %vm273 = vcmask 26624
    %v274 = vsel %vm273, %v263, -inf
    %275 = vmax.xlane.f32.xlu0 %v274
    %v276 = vpop.xlane.xlu0 %275
    %v277 = vsub.f32 %v253, %v269
    %v278 = vsub.f32 %v258, %v272
    %v279 = vsub.f32 %v263, %v276
    %v280 = vmul.f32 %v277, 1.442695
    %v281 = vpow.pop %v280
    %v282 = vmul.f32 %v278, 1.442695
    %v283 = vpow.pop %v282
    %v284 = vmul.f32 %v279, 1.442695
    %v285 = vpow.pop %v284
    %v286 = vsel %vm266, %v281, 0.0
    %287 = vadd.xlane.f32.xlu0 %v286
    %v288 = vpop.xlane.xlu0 %287
    %v289 = vsel %vm266, %v283, 0.0
    %290 = vadd.xlane.f32.xlu0 %v289
    %v291 = vpop.xlane.xlu0 %290
    %v292 = vsel %vm273, %v285, 0.0
    %293 = vadd.xlane.f32.xlu0 %v292
    %v294 = vpop.xlane.xlu0 %293
    %v295 = vrcp.pop %v288
    %v296 = vmul.f32 %v281, %v295
    %v297 = vrcp.pop %v291
    %v298 = vmul.f32 %v283, %v297
    %v299 = vrcp.pop %v294
    %v300 = vmul.f32 %v285, %v299
    %v301 = vlaneseq
    %v302 = vshrl.u32 %v301, 7
    %v303 = vsub.s32 0, %v302
    %v304 = vrot.slane %v20, %v303
    %v306 = vsel %vm266, %v296, 0
    %v309 = vsel %vm266, %v298, 0
    %v312 = vsel %vm266, %v300, 0
    %vm314 = vcmask 1043456
    %v316 = vsel %vm314, %v15, 0
    %318 = vmatprep.subr.mxu0 0.0
    %319 = vmatpush1.msra.mxu0 %v316
    %320 = vmatprep.subr.mxu0 0.0
    %321 = vmatpush1.msra.mxu0 0.0
    %322 = vmatprep.subr.mxu0 0.0
    %323 = vmatpush1.msra.mxu0 0.0
    %324 = vmatprep.subr.mxu0 0.0
    %325 = vmatpush1.msra.mxu0 0.0
    %326 = vmatprep.subr.mxu0 0.0
    %327 = vmatpush1.msra.mxu0 0.0
    %328 = vmatprep.subr.mxu0 0.0
    %329 = vmatpush1.msra.mxu0 0.0
    %330 = vmatprep.subr.mxu0 0.0
    %331 = vmatpush1.msra.mxu0 0.0
    %332 = vmatprep.subr.mxu0 0.0
    %333 = vmatpush1.msra.mxu0 0.0
    %334 = vmatprep.subr.mxu0 0.0
    %335 = vmatpush1.msra.mxu0 0.0
    %336 = vmatprep.subr.mxu0 0.0
    %337 = vmatpush1.msra.mxu0 0.0
    %338 = vmatprep.subr.mxu0 0.0
    %339 = vmatpush1.msra.mxu0 0.0
    %340 = vmatprep.subr.mxu0 0.0
    %341 = vmatpush1.msra.mxu0 0.0
    %342 = vmatprep.subr.mxu0 0.0
    %343 = vmatpush1.msra.mxu0 0.0
    %344 = vmatprep.subr.mxu0 0.0
    %345 = vmatpush1.msra.mxu0 0.0
    %346 = vmatprep.subr.mxu0 0.0
    %347 = vmatpush1.msra.mxu0 0.0
    %348 = vmatprep.subr.mxu0 0.0
    %349 = vmatpush1.msra.mxu0 0.0
    %350 = vmatprep.subr.mxu0 0.0
    %351 = vmatpush1.msra.mxu0 0.0
    %352 = vmatprep.subr.mxu0 0.0
    %353 = vmatpush1.msra.mxu0 0.0
    %354 = vmatprep.subr.mxu0 0.0
    %355 = vmatpush1.msra.mxu0 0.0
    %356 = vmatprep.subr.mxu0 0.0
    %357 = vmatpush1.msra.mxu0 0.0
    %358 = vmatprep.subr.mxu0 0.0
    %359 = vmatpush1.msra.mxu0 0.0
    %360 = vmatprep.subr.mxu0 0.0
    %361 = vmatpush1.msra.mxu0 0.0
    %362 = vmatprep.subr.mxu0 0.0
    %363 = vmatpush1.msra.mxu0 0.0
    %364 = vmatprep.subr.mxu0 0.0
    %365 = vmatpush1.msra.mxu0 0.0
    %366 = vmatprep.subr.mxu0 0.0
    %367 = vmatpush1.msra.mxu0 0.0
    %368 = vmatprep.subr.mxu0 0.0
    %369 = vmatpush1.msra.mxu0 0.0
    %370 = vmatprep.subr.mxu0 0.0
    %371 = vmatpush1.msra.mxu0 0.0
    %372 = vmatprep.subr.mxu0 0.0
    %373 = vmatpush1.msra.mxu0 0.0
    %374 = vmatprep.subr.mxu0 0.0
    %375 = vmatpush1.msra.mxu0 0.0
    %376 = vmatprep.subr.mxu0 0.0
    %377 = vmatpush1.msra.mxu0 0.0
    %378 = vmatprep.subr.mxu0 0.0
    %379 = vmatpush1.msra.mxu0 0.0
    %380 = vmatprep.subr.mxu0 0.0
    %381 = vmatpush1.msra.mxu0 0.0
    %382 = vmatprep.mubr.f32.mxu0 0.0
    %383 = vmatmul.mubr.f32.gmra.mrb[0].mxu0 %v306
    %v384 = vpop.f32.mrb[0].mxu0
    %v385 = vadd.f32 %v304, %v384
    %v386 = vpop.f32.mrb[0].mxu0
    %387 = vmatprep.mubr.f32.mxu0 0.0
    %388 = vmatmul.mubr.f32.gmra.mrb[0].mxu0 %v309
    %v389 = vpop.f32.mrb[0].mxu0
    %v390 = vadd.f32 %v304, %v389
    %v391 = vpop.f32.mrb[0].mxu0
    %392 = vmatprep.mubr.f32.mxu0 0.0
    %393 = vmatmul.mubr.f32.gmra.mrb[0].mxu0 %v312
    %v394 = vpop.f32.mrb[0].mxu0
    %v395 = vadd.f32 %v304, %v394
    %v396 = vpop.f32.mrb[0].mxu0
    %397 = vdwg.mxu0
    %399 = vset.pattern.permute.xlu0 0
    %400 = vperm.xlu0 %399, %v24
    %v401 = vpop.permute.xlu0 %400
    %v403 = vmul.f32 %v401, %v16
    %404 = vset.pattern.permute.xlu0 1
    %405 = vperm.xlu0 %404, %v24
    %v406 = vpop.permute.xlu0 %405
    %v408 = vmul.f32 %v406, %v17
    %v409 = vadd.f32 %v403, %v408
    %410 = vset.pattern.permute.xlu0 2
    %411 = vperm.xlu0 %410, %v24
    %v412 = vpop.permute.xlu0 %411
    %v414 = vmul.f32 %v412, %v18
    %v415 = vadd.f32 %v409, %v414
    %416 = vset.pattern.permute.xlu0 3
    %417 = vperm.xlu0 %416, %v24
    %v418 = vpop.permute.xlu0 %417
    %v420 = vmul.f32 %v418, %v19
    %v421 = vadd.f32 %v415, %v420
    %v422 = vadd.f32 %v385, %v421
    %v423 = vtanh.pop %v422
    %v424 = vmul.f32 %v423, %v21
    %v425 = vadd.f32 %v424, %v22
    %427 = vrot.lane.b32.xlu0 %v25, 4
    %v428 = vpop.permute.xlu0 %427
    %v430 = vmul.f32 %v425, %v428
    %432 = vrot.lane.b32.xlu0 %v425, 120
    %v433 = vpop.permute.xlu0 %432
    %v435 = vmul.f32 %v425, %v433
    %437 = vrot.lane.b32.xlu0 %v435, 4
    %v438 = vpop.permute.xlu0 %437
    %v440 = vadd.f32 %v430, %v438
    %v441 = vtanh.pop %v440
    %443 = vrot.lane.b32.xlu0 %v441, 8
    %v444 = vpop.permute.xlu0 %443
    %v446 = vmul.f32 %v425, %v444
    %448 = vset.pattern.permute.xlu0 12
    %449 = vperm.xlu0 %448, %v446
    %v450 = vpop.permute.xlu0 %449
    %v452 = vmul.f32 %v450, %v16
    %453 = vset.pattern.permute.xlu0 13
    %454 = vperm.xlu0 %453, %v446
    %v455 = vpop.permute.xlu0 %454
    %v457 = vmul.f32 %v455, %v17
    %v458 = vadd.f32 %v452, %v457
    %459 = vset.pattern.permute.xlu0 14
    %460 = vperm.xlu0 %459, %v446
    %v461 = vpop.permute.xlu0 %460
    %v463 = vmul.f32 %v461, %v18
    %v464 = vadd.f32 %v458, %v463
    %465 = vset.pattern.permute.xlu0 15
    %466 = vperm.xlu0 %465, %v446
    %v467 = vpop.permute.xlu0 %466
    %v469 = vmul.f32 %v467, %v19
    %v470 = vadd.f32 %v464, %v469
    %v472 = vrot.slane %v470, 7
    %v474 = vadd.f32 %v385, %v472
    %v475 = vtanh.pop %v474
    %v477 = vrot.slane %v21, 7
    %v479 = vmul.f32 %v475, %v477
    %v481 = vrot.slane %v22, 7
    %v483 = vadd.f32 %v479, %v481
    %v485 = vrot.slane %v440, 7
    %v487 = vmul.f32 %v483, %v485
    %489 = vrot.lane.b32.xlu0 %v483, 120
    %v490 = vpop.permute.xlu0 %489
    %v492 = vmul.f32 %v483, %v490
    %494 = vrot.lane.b32.xlu0 %v492, 4
    %v495 = vpop.permute.xlu0 %494
    %v497 = vadd.f32 %v487, %v495
    %v498 = vtanh.pop %v497
    %500 = vrot.lane.b32.xlu0 %v498, 8
    %v501 = vpop.permute.xlu0 %500
    %v503 = vmul.f32 %v483, %v501
    %505 = vset.pattern.permute.xlu0 12
    %506 = vperm.xlu0 %505, %v503
    %v507 = vpop.permute.xlu0 %506
    %v510 = vrot.slane %v16, 7
    %v512 = vmul.f32 %v507, %v510
    %513 = vset.pattern.permute.xlu0 13
    %514 = vperm.xlu0 %513, %v503
    %v515 = vpop.permute.xlu0 %514
    %v518 = vrot.slane %v17, 7
    %v520 = vmul.f32 %v515, %v518
    %v521 = vadd.f32 %v512, %v520
    %522 = vset.pattern.permute.xlu0 14
    %523 = vperm.xlu0 %522, %v503
    %v524 = vpop.permute.xlu0 %523
    %v527 = vrot.slane %v18, 7
    %v529 = vmul.f32 %v524, %v527
    %v530 = vadd.f32 %v521, %v529
    %531 = vset.pattern.permute.xlu0 15
    %532 = vperm.xlu0 %531, %v503
    %v533 = vpop.permute.xlu0 %532
    %v536 = vrot.slane %v19, 7
    %v538 = vmul.f32 %v533, %v536
    %v539 = vadd.f32 %v530, %v538
    %v541 = vrot.slane %v539, 7
    %v543 = vadd.f32 %v385, %v541
    %v544 = vtanh.pop %v543
    %v545 = vrot.slane %v21, 6
    %v547 = vmul.f32 %v544, %v545
    %v548 = vrot.slane %v22, 6
    %v550 = vadd.f32 %v547, %v548
    %v552 = vrot.slane %v497, 7
    %v554 = vmul.f32 %v550, %v552
    %556 = vrot.lane.b32.xlu0 %v550, 120
    %v557 = vpop.permute.xlu0 %556
    %v559 = vmul.f32 %v550, %v557
    %561 = vrot.lane.b32.xlu0 %v559, 4
    %v562 = vpop.permute.xlu0 %561
    %v564 = vadd.f32 %v554, %v562
    %v565 = vtanh.pop %v564
    %567 = vrot.lane.b32.xlu0 %v565, 8
    %v568 = vpop.permute.xlu0 %567
    %v570 = vmul.f32 %v550, %v568
    %572 = vset.pattern.permute.xlu0 12
    %573 = vperm.xlu0 %572, %v570
    %v574 = vpop.permute.xlu0 %573
    %v576 = vrot.slane %v16, 6
    %v578 = vmul.f32 %v574, %v576
    %579 = vset.pattern.permute.xlu0 13
    %580 = vperm.xlu0 %579, %v570
    %v581 = vpop.permute.xlu0 %580
    %v583 = vrot.slane %v17, 6
    %v585 = vmul.f32 %v581, %v583
    %v586 = vadd.f32 %v578, %v585
    %587 = vset.pattern.permute.xlu0 14
    %588 = vperm.xlu0 %587, %v570
    %v589 = vpop.permute.xlu0 %588
    %v591 = vrot.slane %v18, 6
    %v593 = vmul.f32 %v589, %v591
    %v594 = vadd.f32 %v586, %v593
    %595 = vset.pattern.permute.xlu0 15
    %596 = vperm.xlu0 %595, %v570
    %v597 = vpop.permute.xlu0 %596
    %v599 = vrot.slane %v19, 6
    %v601 = vmul.f32 %v597, %v599
    %v602 = vadd.f32 %v594, %v601
    %v604 = vrot.slane %v602, 7
    %v606 = vadd.f32 %v385, %v604
    %v607 = vtanh.pop %v606
    %v608 = vrot.slane %v21, 5
    %v610 = vmul.f32 %v607, %v608
    %v611 = vrot.slane %v22, 5
    %v613 = vadd.f32 %v610, %v611
    %v615 = vrot.slane %v564, 7
    %v617 = vmul.f32 %v613, %v615
    %619 = vrot.lane.b32.xlu0 %v613, 120
    %v620 = vpop.permute.xlu0 %619
    %v622 = vmul.f32 %v613, %v620
    %624 = vrot.lane.b32.xlu0 %v622, 4
    %v625 = vpop.permute.xlu0 %624
    %v627 = vadd.f32 %v617, %v625
    %v628 = vtanh.pop %v627
    %630 = vrot.lane.b32.xlu0 %v628, 8
    %v631 = vpop.permute.xlu0 %630
    %v633 = vmul.f32 %v613, %v631
    %635 = vset.pattern.permute.xlu0 12
    %636 = vperm.xlu0 %635, %v633
    %v637 = vpop.permute.xlu0 %636
    %v639 = vrot.slane %v16, 5
    %v641 = vmul.f32 %v637, %v639
    %642 = vset.pattern.permute.xlu0 13
    %643 = vperm.xlu0 %642, %v633
    %v644 = vpop.permute.xlu0 %643
    %v646 = vrot.slane %v17, 5
    %v648 = vmul.f32 %v644, %v646
    %v649 = vadd.f32 %v641, %v648
    %650 = vset.pattern.permute.xlu0 14
    %651 = vperm.xlu0 %650, %v633
    %v652 = vpop.permute.xlu0 %651
    %v654 = vrot.slane %v18, 5
    %v656 = vmul.f32 %v652, %v654
    %v657 = vadd.f32 %v649, %v656
    %658 = vset.pattern.permute.xlu0 15
    %659 = vperm.xlu0 %658, %v633
    %v660 = vpop.permute.xlu0 %659
    %v662 = vrot.slane %v19, 5
    %v664 = vmul.f32 %v660, %v662
    %v665 = vadd.f32 %v657, %v664
    %v667 = vrot.slane %v665, 7
    %v669 = vadd.f32 %v385, %v667
    %v670 = vtanh.pop %v669
    %v671 = vrot.slane %v21, 4
    %v673 = vmul.f32 %v670, %v671
    %v674 = vrot.slane %v22, 4
    %v676 = vadd.f32 %v673, %v674
    %v678 = vrot.slane %v627, 7
    %v680 = vmul.f32 %v676, %v678
    %682 = vrot.lane.b32.xlu0 %v676, 120
    %v683 = vpop.permute.xlu0 %682
    %v685 = vmul.f32 %v676, %v683
    %687 = vrot.lane.b32.xlu0 %v685, 4
    %v688 = vpop.permute.xlu0 %687
    %v690 = vadd.f32 %v680, %v688
    %v691 = vtanh.pop %v690
    %693 = vrot.lane.b32.xlu0 %v691, 8
    %v694 = vpop.permute.xlu0 %693
    %v696 = vmul.f32 %v676, %v694
    %698 = vset.pattern.permute.xlu0 12
    %699 = vperm.xlu0 %698, %v696
    %v700 = vpop.permute.xlu0 %699
    %v702 = vrot.slane %v16, 4
    %v704 = vmul.f32 %v700, %v702
    %705 = vset.pattern.permute.xlu0 13
    %706 = vperm.xlu0 %705, %v696
    %v707 = vpop.permute.xlu0 %706
    %v709 = vrot.slane %v17, 4
    %v711 = vmul.f32 %v707, %v709
    %v712 = vadd.f32 %v704, %v711
    %713 = vset.pattern.permute.xlu0 14
    %714 = vperm.xlu0 %713, %v696
    %v715 = vpop.permute.xlu0 %714
    %v717 = vrot.slane %v18, 4
    %v719 = vmul.f32 %v715, %v717
    %v720 = vadd.f32 %v712, %v719
    %721 = vset.pattern.permute.xlu0 15
    %722 = vperm.xlu0 %721, %v696
    %v723 = vpop.permute.xlu0 %722
    %v725 = vrot.slane %v19, 4
    %v727 = vmul.f32 %v723, %v725
    %v728 = vadd.f32 %v720, %v727
    %v730 = vrot.slane %v728, 7
    %v732 = vadd.f32 %v385, %v730
    %v733 = vtanh.pop %v732
    %v734 = vrot.slane %v21, 3
    %v736 = vmul.f32 %v733, %v734
    %v737 = vrot.slane %v22, 3
    %v739 = vadd.f32 %v736, %v737
    %v741 = vrot.slane %v690, 7
    %v743 = vmul.f32 %v739, %v741
    %745 = vrot.lane.b32.xlu0 %v739, 120
    %v746 = vpop.permute.xlu0 %745
    %v748 = vmul.f32 %v739, %v746
    %750 = vrot.lane.b32.xlu0 %v748, 4
    %v751 = vpop.permute.xlu0 %750
    %v753 = vadd.f32 %v743, %v751
    %v754 = vtanh.pop %v753
    %756 = vrot.lane.b32.xlu0 %v754, 8
    %v757 = vpop.permute.xlu0 %756
    %v759 = vmul.f32 %v739, %v757
    %761 = vset.pattern.permute.xlu0 12
    %762 = vperm.xlu0 %761, %v759
    %v763 = vpop.permute.xlu0 %762
    %v765 = vrot.slane %v16, 3
    %v767 = vmul.f32 %v763, %v765
    %768 = vset.pattern.permute.xlu0 13
    %769 = vperm.xlu0 %768, %v759
    %v770 = vpop.permute.xlu0 %769
    %v772 = vrot.slane %v17, 3
    %v774 = vmul.f32 %v770, %v772
    %v775 = vadd.f32 %v767, %v774
    %776 = vset.pattern.permute.xlu0 14
    %777 = vperm.xlu0 %776, %v759
    %v778 = vpop.permute.xlu0 %777
    %v780 = vrot.slane %v18, 3
    %v782 = vmul.f32 %v778, %v780
    %v783 = vadd.f32 %v775, %v782
    %784 = vset.pattern.permute.xlu0 15
    %785 = vperm.xlu0 %784, %v759
    %v786 = vpop.permute.xlu0 %785
    %v788 = vrot.slane %v19, 3
    %v790 = vmul.f32 %v786, %v788
    %v791 = vadd.f32 %v783, %v790
    %v793 = vrot.slane %v791, 7
    %v795 = vadd.f32 %v385, %v793
    %v796 = vtanh.pop %v795
    %v797 = vrot.slane %v21, 2
    %v799 = vmul.f32 %v796, %v797
    %v800 = vrot.slane %v22, 2
    %v802 = vadd.f32 %v799, %v800
    %v804 = vrot.slane %v753, 7
    %v806 = vmul.f32 %v802, %v804
    %808 = vrot.lane.b32.xlu0 %v802, 120
    %v809 = vpop.permute.xlu0 %808
    %v811 = vmul.f32 %v802, %v809
    %813 = vrot.lane.b32.xlu0 %v811, 4
    %v814 = vpop.permute.xlu0 %813
    %v816 = vadd.f32 %v806, %v814
    %v817 = vtanh.pop %v816
    %819 = vrot.lane.b32.xlu0 %v817, 8
    %v820 = vpop.permute.xlu0 %819
    %v822 = vmul.f32 %v802, %v820
    %824 = vset.pattern.permute.xlu0 12
    %825 = vperm.xlu0 %824, %v822
    %v826 = vpop.permute.xlu0 %825
    %v828 = vrot.slane %v16, 2
    %v830 = vmul.f32 %v826, %v828
    %831 = vset.pattern.permute.xlu0 13
    %832 = vperm.xlu0 %831, %v822
    %v833 = vpop.permute.xlu0 %832
    %v835 = vrot.slane %v17, 2
    %v837 = vmul.f32 %v833, %v835
    %v838 = vadd.f32 %v830, %v837
    %839 = vset.pattern.permute.xlu0 14
    %840 = vperm.xlu0 %839, %v822
    %v841 = vpop.permute.xlu0 %840
    %v843 = vrot.slane %v18, 2
    %v845 = vmul.f32 %v841, %v843
    %v846 = vadd.f32 %v838, %v845
    %847 = vset.pattern.permute.xlu0 15
    %848 = vperm.xlu0 %847, %v822
    %v849 = vpop.permute.xlu0 %848
    %v851 = vrot.slane %v19, 2
    %v853 = vmul.f32 %v849, %v851
    %v854 = vadd.f32 %v846, %v853
    %v856 = vrot.slane %v854, 7
    %v858 = vadd.f32 %v385, %v856
    %v859 = vtanh.pop %v858
    %v860 = vrot.slane %v21, 1
    %v862 = vmul.f32 %v859, %v860
    %v863 = vrot.slane %v22, 1
    %v865 = vadd.f32 %v862, %v863
    %v867 = vrot.slane %v816, 7
    %v869 = vmul.f32 %v865, %v867
    %871 = vrot.lane.b32.xlu0 %v865, 120
    %v872 = vpop.permute.xlu0 %871
    %v874 = vmul.f32 %v865, %v872
    %876 = vrot.lane.b32.xlu0 %v874, 4
    %v877 = vpop.permute.xlu0 %876
    %v879 = vadd.f32 %v869, %v877
    %v880 = vtanh.pop %v879
    %882 = vrot.lane.b32.xlu0 %v880, 8
    %v883 = vpop.permute.xlu0 %882
    %v885 = vmul.f32 %v865, %v883
    %887 = vset.pattern.permute.xlu0 12
    %888 = vperm.xlu0 %887, %v885
    %v889 = vpop.permute.xlu0 %888
    %v891 = vrot.slane %v16, 1
    %v893 = vmul.f32 %v889, %v891
    %894 = vset.pattern.permute.xlu0 13
    %895 = vperm.xlu0 %894, %v885
    %v896 = vpop.permute.xlu0 %895
    %v898 = vrot.slane %v17, 1
    %v900 = vmul.f32 %v896, %v898
    %v901 = vadd.f32 %v893, %v900
    %902 = vset.pattern.permute.xlu0 14
    %903 = vperm.xlu0 %902, %v885
    %v904 = vpop.permute.xlu0 %903
    %v906 = vrot.slane %v18, 1
    %v908 = vmul.f32 %v904, %v906
    %v909 = vadd.f32 %v901, %v908
    %910 = vset.pattern.permute.xlu0 15
    %911 = vperm.xlu0 %910, %v885
    %v912 = vpop.permute.xlu0 %911
    %v914 = vrot.slane %v19, 1
    %v916 = vmul.f32 %v912, %v914
    %v917 = vadd.f32 %v909, %v916
    %v919 = vrot.slane %v917, 7
    %v921 = vadd.f32 %v390, %v919
    %v922 = vtanh.pop %v921
    %v923 = vmul.f32 %v922, %v21
    %v924 = vadd.f32 %v923, %v22
    %v926 = vrot.slane %v879, 7
    %v928 = vmul.f32 %v924, %v926
    %930 = vrot.lane.b32.xlu0 %v924, 120
    %v931 = vpop.permute.xlu0 %930
    %v933 = vmul.f32 %v924, %v931
    %935 = vrot.lane.b32.xlu0 %v933, 4
    %v936 = vpop.permute.xlu0 %935
    %v938 = vadd.f32 %v928, %v936
    %v939 = vtanh.pop %v938
    %941 = vrot.lane.b32.xlu0 %v939, 8
    %v942 = vpop.permute.xlu0 %941
    %v944 = vmul.f32 %v924, %v942
    %946 = vset.pattern.permute.xlu0 12
    %947 = vperm.xlu0 %946, %v944
    %v948 = vpop.permute.xlu0 %947
    %v950 = vmul.f32 %v948, %v16
    %951 = vset.pattern.permute.xlu0 13
    %952 = vperm.xlu0 %951, %v944
    %v953 = vpop.permute.xlu0 %952
    %v955 = vmul.f32 %v953, %v17
    %v956 = vadd.f32 %v950, %v955
    %957 = vset.pattern.permute.xlu0 14
    %958 = vperm.xlu0 %957, %v944
    %v959 = vpop.permute.xlu0 %958
    %v961 = vmul.f32 %v959, %v18
    %v962 = vadd.f32 %v956, %v961
    %963 = vset.pattern.permute.xlu0 15
    %964 = vperm.xlu0 %963, %v944
    %v965 = vpop.permute.xlu0 %964
    %v967 = vmul.f32 %v965, %v19
    %v968 = vadd.f32 %v962, %v967
    %v970 = vrot.slane %v968, 7
    %v972 = vadd.f32 %v390, %v970
    %v973 = vtanh.pop %v972
    %v974 = vmul.f32 %v973, %v477
    %v975 = vadd.f32 %v974, %v481
    %v977 = vrot.slane %v938, 7
    %v979 = vmul.f32 %v975, %v977
    %981 = vrot.lane.b32.xlu0 %v975, 120
    %v982 = vpop.permute.xlu0 %981
    %v984 = vmul.f32 %v975, %v982
    %986 = vrot.lane.b32.xlu0 %v984, 4
    %v987 = vpop.permute.xlu0 %986
    %v989 = vadd.f32 %v979, %v987
    %v990 = vtanh.pop %v989
    %992 = vrot.lane.b32.xlu0 %v990, 8
    %v993 = vpop.permute.xlu0 %992
    %v995 = vmul.f32 %v975, %v993
    %997 = vset.pattern.permute.xlu0 12
    %998 = vperm.xlu0 %997, %v995
    %v999 = vpop.permute.xlu0 %998
    %v1001 = vmul.f32 %v999, %v510
    %1002 = vset.pattern.permute.xlu0 13
    %1003 = vperm.xlu0 %1002, %v995
    %v1004 = vpop.permute.xlu0 %1003
    %v1006 = vmul.f32 %v1004, %v518
    %v1007 = vadd.f32 %v1001, %v1006
    %1008 = vset.pattern.permute.xlu0 14
    %1009 = vperm.xlu0 %1008, %v995
    %v1010 = vpop.permute.xlu0 %1009
    %v1012 = vmul.f32 %v1010, %v527
    %v1013 = vadd.f32 %v1007, %v1012
    %1014 = vset.pattern.permute.xlu0 15
    %1015 = vperm.xlu0 %1014, %v995
    %v1016 = vpop.permute.xlu0 %1015
    %v1018 = vmul.f32 %v1016, %v536
    %v1019 = vadd.f32 %v1013, %v1018
    %v1021 = vrot.slane %v1019, 7
    %v1023 = vadd.f32 %v390, %v1021
    %v1024 = vtanh.pop %v1023
    %v1025 = vmul.f32 %v1024, %v545
    %v1026 = vadd.f32 %v1025, %v548
    %v1028 = vrot.slane %v989, 7
    %v1030 = vmul.f32 %v1026, %v1028
    %1032 = vrot.lane.b32.xlu0 %v1026, 120
    %v1033 = vpop.permute.xlu0 %1032
    %v1035 = vmul.f32 %v1026, %v1033
    %1037 = vrot.lane.b32.xlu0 %v1035, 4
    %v1038 = vpop.permute.xlu0 %1037
    %v1040 = vadd.f32 %v1030, %v1038
    %v1041 = vtanh.pop %v1040
    %1043 = vrot.lane.b32.xlu0 %v1041, 8
    %v1044 = vpop.permute.xlu0 %1043
    %v1046 = vmul.f32 %v1026, %v1044
    %1048 = vset.pattern.permute.xlu0 12
    %1049 = vperm.xlu0 %1048, %v1046
    %v1050 = vpop.permute.xlu0 %1049
    %v1052 = vmul.f32 %v1050, %v576
    %1053 = vset.pattern.permute.xlu0 13
    %1054 = vperm.xlu0 %1053, %v1046
    %v1055 = vpop.permute.xlu0 %1054
    %v1057 = vmul.f32 %v1055, %v583
    %v1058 = vadd.f32 %v1052, %v1057
    %1059 = vset.pattern.permute.xlu0 14
    %1060 = vperm.xlu0 %1059, %v1046
    %v1061 = vpop.permute.xlu0 %1060
    %v1063 = vmul.f32 %v1061, %v591
    %v1064 = vadd.f32 %v1058, %v1063
    %1065 = vset.pattern.permute.xlu0 15
    %1066 = vperm.xlu0 %1065, %v1046
    %v1067 = vpop.permute.xlu0 %1066
    %v1069 = vmul.f32 %v1067, %v599
    %v1070 = vadd.f32 %v1064, %v1069
    %v1072 = vrot.slane %v1070, 7
    %v1074 = vadd.f32 %v390, %v1072
    %v1075 = vtanh.pop %v1074
    %v1076 = vmul.f32 %v1075, %v608
    %v1077 = vadd.f32 %v1076, %v611
    %v1079 = vrot.slane %v1040, 7
    %v1081 = vmul.f32 %v1077, %v1079
    %1083 = vrot.lane.b32.xlu0 %v1077, 120
    %v1084 = vpop.permute.xlu0 %1083
    %v1086 = vmul.f32 %v1077, %v1084
    %1088 = vrot.lane.b32.xlu0 %v1086, 4
    %v1089 = vpop.permute.xlu0 %1088
    %v1091 = vadd.f32 %v1081, %v1089
    %v1092 = vtanh.pop %v1091
    %1094 = vrot.lane.b32.xlu0 %v1092, 8
    %v1095 = vpop.permute.xlu0 %1094
    %v1097 = vmul.f32 %v1077, %v1095
    %1099 = vset.pattern.permute.xlu0 12
    %1100 = vperm.xlu0 %1099, %v1097
    %v1101 = vpop.permute.xlu0 %1100
    %v1103 = vmul.f32 %v1101, %v639
    %1104 = vset.pattern.permute.xlu0 13
    %1105 = vperm.xlu0 %1104, %v1097
    %v1106 = vpop.permute.xlu0 %1105
    %v1108 = vmul.f32 %v1106, %v646
    %v1109 = vadd.f32 %v1103, %v1108
    %1110 = vset.pattern.permute.xlu0 14
    %1111 = vperm.xlu0 %1110, %v1097
    %v1112 = vpop.permute.xlu0 %1111
    %v1114 = vmul.f32 %v1112, %v654
    %v1115 = vadd.f32 %v1109, %v1114
    %1116 = vset.pattern.permute.xlu0 15
    %1117 = vperm.xlu0 %1116, %v1097
    %v1118 = vpop.permute.xlu0 %1117
    %v1120 = vmul.f32 %v1118, %v662
    %v1121 = vadd.f32 %v1115, %v1120
    %v1123 = vrot.slane %v1121, 7
    %v1125 = vadd.f32 %v390, %v1123
    %v1126 = vtanh.pop %v1125
    %v1127 = vmul.f32 %v1126, %v671
    %v1128 = vadd.f32 %v1127, %v674
    %v1130 = vrot.slane %v1091, 7
    %v1132 = vmul.f32 %v1128, %v1130
    %1134 = vrot.lane.b32.xlu0 %v1128, 120
    %v1135 = vpop.permute.xlu0 %1134
    %v1137 = vmul.f32 %v1128, %v1135
    %1139 = vrot.lane.b32.xlu0 %v1137, 4
    %v1140 = vpop.permute.xlu0 %1139
    %v1142 = vadd.f32 %v1132, %v1140
    %v1143 = vtanh.pop %v1142
    %1145 = vrot.lane.b32.xlu0 %v1143, 8
    %v1146 = vpop.permute.xlu0 %1145
    %v1148 = vmul.f32 %v1128, %v1146
    %1150 = vset.pattern.permute.xlu0 12
    %1151 = vperm.xlu0 %1150, %v1148
    %v1152 = vpop.permute.xlu0 %1151
    %v1154 = vmul.f32 %v1152, %v702
    %1155 = vset.pattern.permute.xlu0 13
    %1156 = vperm.xlu0 %1155, %v1148
    %v1157 = vpop.permute.xlu0 %1156
    %v1159 = vmul.f32 %v1157, %v709
    %v1160 = vadd.f32 %v1154, %v1159
    %1161 = vset.pattern.permute.xlu0 14
    %1162 = vperm.xlu0 %1161, %v1148
    %v1163 = vpop.permute.xlu0 %1162
    %v1165 = vmul.f32 %v1163, %v717
    %v1166 = vadd.f32 %v1160, %v1165
    %1167 = vset.pattern.permute.xlu0 15
    %1168 = vperm.xlu0 %1167, %v1148
    %v1169 = vpop.permute.xlu0 %1168
    %v1171 = vmul.f32 %v1169, %v725
    %v1172 = vadd.f32 %v1166, %v1171
    %v1174 = vrot.slane %v1172, 7
    %v1176 = vadd.f32 %v390, %v1174
    %v1177 = vtanh.pop %v1176
    %v1178 = vmul.f32 %v1177, %v734
    %v1179 = vadd.f32 %v1178, %v737
    %v1181 = vrot.slane %v1142, 7
    %v1183 = vmul.f32 %v1179, %v1181
    %1185 = vrot.lane.b32.xlu0 %v1179, 120
    %v1186 = vpop.permute.xlu0 %1185
    %v1188 = vmul.f32 %v1179, %v1186
    %1190 = vrot.lane.b32.xlu0 %v1188, 4
    %v1191 = vpop.permute.xlu0 %1190
    %v1193 = vadd.f32 %v1183, %v1191
    %v1194 = vtanh.pop %v1193
    %1196 = vrot.lane.b32.xlu0 %v1194, 8
    %v1197 = vpop.permute.xlu0 %1196
    %v1199 = vmul.f32 %v1179, %v1197
    %1201 = vset.pattern.permute.xlu0 12
    %1202 = vperm.xlu0 %1201, %v1199
    %v1203 = vpop.permute.xlu0 %1202
    %v1205 = vmul.f32 %v1203, %v765
    %1206 = vset.pattern.permute.xlu0 13
    %1207 = vperm.xlu0 %1206, %v1199
    %v1208 = vpop.permute.xlu0 %1207
    %v1210 = vmul.f32 %v1208, %v772
    %v1211 = vadd.f32 %v1205, %v1210
    %1212 = vset.pattern.permute.xlu0 14
    %1213 = vperm.xlu0 %1212, %v1199
    %v1214 = vpop.permute.xlu0 %1213
    %v1216 = vmul.f32 %v1214, %v780
    %v1217 = vadd.f32 %v1211, %v1216
    %1218 = vset.pattern.permute.xlu0 15
    %1219 = vperm.xlu0 %1218, %v1199
    %v1220 = vpop.permute.xlu0 %1219
    %v1222 = vmul.f32 %v1220, %v788
    %v1223 = vadd.f32 %v1217, %v1222
    %v1225 = vrot.slane %v1223, 7
    %v1227 = vadd.f32 %v390, %v1225
    %v1228 = vtanh.pop %v1227
    %v1229 = vmul.f32 %v1228, %v797
    %v1230 = vadd.f32 %v1229, %v800
    %v1232 = vrot.slane %v1193, 7
    %v1234 = vmul.f32 %v1230, %v1232
    %1236 = vrot.lane.b32.xlu0 %v1230, 120
    %v1237 = vpop.permute.xlu0 %1236
    %v1239 = vmul.f32 %v1230, %v1237
    %1241 = vrot.lane.b32.xlu0 %v1239, 4
    %v1242 = vpop.permute.xlu0 %1241
    %v1244 = vadd.f32 %v1234, %v1242
    %v1245 = vtanh.pop %v1244
    %1247 = vrot.lane.b32.xlu0 %v1245, 8
    %v1248 = vpop.permute.xlu0 %1247
    %v1250 = vmul.f32 %v1230, %v1248
    %1252 = vset.pattern.permute.xlu0 12
    %1253 = vperm.xlu0 %1252, %v1250
    %v1254 = vpop.permute.xlu0 %1253
    %v1256 = vmul.f32 %v1254, %v828
    %1257 = vset.pattern.permute.xlu0 13
    %1258 = vperm.xlu0 %1257, %v1250
    %v1259 = vpop.permute.xlu0 %1258
    %v1261 = vmul.f32 %v1259, %v835
    %v1262 = vadd.f32 %v1256, %v1261
    %1263 = vset.pattern.permute.xlu0 14
    %1264 = vperm.xlu0 %1263, %v1250
    %v1265 = vpop.permute.xlu0 %1264
    %v1267 = vmul.f32 %v1265, %v843
    %v1268 = vadd.f32 %v1262, %v1267
    %1269 = vset.pattern.permute.xlu0 15
    %1270 = vperm.xlu0 %1269, %v1250
    %v1271 = vpop.permute.xlu0 %1270
    %v1273 = vmul.f32 %v1271, %v851
    %v1274 = vadd.f32 %v1268, %v1273
    %v1276 = vrot.slane %v1274, 7
    %v1278 = vadd.f32 %v390, %v1276
    %v1279 = vtanh.pop %v1278
    %v1280 = vmul.f32 %v1279, %v860
    %v1281 = vadd.f32 %v1280, %v863
    %v1283 = vrot.slane %v1244, 7
    %v1285 = vmul.f32 %v1281, %v1283
    %1287 = vrot.lane.b32.xlu0 %v1281, 120
    %v1288 = vpop.permute.xlu0 %1287
    %v1290 = vmul.f32 %v1281, %v1288
    %1292 = vrot.lane.b32.xlu0 %v1290, 4
    %v1293 = vpop.permute.xlu0 %1292
    %v1295 = vadd.f32 %v1285, %v1293
    %v1296 = vtanh.pop %v1295
    %1298 = vrot.lane.b32.xlu0 %v1296, 8
    %v1299 = vpop.permute.xlu0 %1298
    %v1301 = vmul.f32 %v1281, %v1299
    %1303 = vset.pattern.permute.xlu0 12
    %1304 = vperm.xlu0 %1303, %v1301
    %v1305 = vpop.permute.xlu0 %1304
    %v1307 = vmul.f32 %v1305, %v891
    %1308 = vset.pattern.permute.xlu0 13
    %1309 = vperm.xlu0 %1308, %v1301
    %v1310 = vpop.permute.xlu0 %1309
    %v1312 = vmul.f32 %v1310, %v898
    %v1313 = vadd.f32 %v1307, %v1312
    %1314 = vset.pattern.permute.xlu0 14
    %1315 = vperm.xlu0 %1314, %v1301
    %v1316 = vpop.permute.xlu0 %1315
    %v1318 = vmul.f32 %v1316, %v906
    %v1319 = vadd.f32 %v1313, %v1318
    %1320 = vset.pattern.permute.xlu0 15
    %1321 = vperm.xlu0 %1320, %v1301
    %v1322 = vpop.permute.xlu0 %1321
    %v1324 = vmul.f32 %v1322, %v914
    %v1325 = vadd.f32 %v1319, %v1324
    %v1327 = vrot.slane %v1325, 7
    %v1329 = vadd.f32 %v395, %v1327
    %v1330 = vtanh.pop %v1329
    %v1331 = vmul.f32 %v1330, %v21
    %v1332 = vadd.f32 %v1331, %v22
    %v1334 = vrot.slane %v1295, 7
    %v1336 = vmul.f32 %v1332, %v1334
    %1338 = vrot.lane.b32.xlu0 %v1332, 120
    %v1339 = vpop.permute.xlu0 %1338
    %v1341 = vmul.f32 %v1332, %v1339
    %1343 = vrot.lane.b32.xlu0 %v1341, 4
    %v1344 = vpop.permute.xlu0 %1343
    %v1346 = vadd.f32 %v1336, %v1344
    %v1347 = vtanh.pop %v1346
    %1349 = vrot.lane.b32.xlu0 %v1347, 8
    %v1350 = vpop.permute.xlu0 %1349
    %v1352 = vmul.f32 %v1332, %v1350
    %1354 = vset.pattern.permute.xlu0 12
    %1355 = vperm.xlu0 %1354, %v1352
    %v1356 = vpop.permute.xlu0 %1355
    %v1358 = vmul.f32 %v1356, %v16
    %1359 = vset.pattern.permute.xlu0 13
    %1360 = vperm.xlu0 %1359, %v1352
    %v1361 = vpop.permute.xlu0 %1360
    %v1363 = vmul.f32 %v1361, %v17
    %v1364 = vadd.f32 %v1358, %v1363
    %1365 = vset.pattern.permute.xlu0 14
    %1366 = vperm.xlu0 %1365, %v1352
    %v1367 = vpop.permute.xlu0 %1366
    %v1369 = vmul.f32 %v1367, %v18
    %v1370 = vadd.f32 %v1364, %v1369
    %1371 = vset.pattern.permute.xlu0 15
    %1372 = vperm.xlu0 %1371, %v1352
    %v1373 = vpop.permute.xlu0 %1372
    %v1375 = vmul.f32 %v1373, %v19
    %v1376 = vadd.f32 %v1370, %v1375
    %v1378 = vrot.slane %v1376, 7
    %v1380 = vadd.f32 %v395, %v1378
    %v1381 = vtanh.pop %v1380
    %v1382 = vmul.f32 %v1381, %v477
    %v1383 = vadd.f32 %v1382, %v481
    %v1385 = vrot.slane %v1346, 7
    %v1387 = vmul.f32 %v1383, %v1385
    %1389 = vrot.lane.b32.xlu0 %v1383, 120
    %v1390 = vpop.permute.xlu0 %1389
    %v1392 = vmul.f32 %v1383, %v1390
    %1394 = vrot.lane.b32.xlu0 %v1392, 4
    %v1395 = vpop.permute.xlu0 %1394
    %v1397 = vadd.f32 %v1387, %v1395
    %v1398 = vtanh.pop %v1397
    %1400 = vrot.lane.b32.xlu0 %v1398, 8
    %v1401 = vpop.permute.xlu0 %1400
    %v1403 = vmul.f32 %v1383, %v1401
    %1405 = vset.pattern.permute.xlu0 12
    %1406 = vperm.xlu0 %1405, %v1403
    %v1407 = vpop.permute.xlu0 %1406
    %v1409 = vmul.f32 %v1407, %v510
    %1410 = vset.pattern.permute.xlu0 13
    %1411 = vperm.xlu0 %1410, %v1403
    %v1412 = vpop.permute.xlu0 %1411
    %v1414 = vmul.f32 %v1412, %v518
    %v1415 = vadd.f32 %v1409, %v1414
    %1416 = vset.pattern.permute.xlu0 14
    %1417 = vperm.xlu0 %1416, %v1403
    %v1418 = vpop.permute.xlu0 %1417
    %v1420 = vmul.f32 %v1418, %v527
    %v1421 = vadd.f32 %v1415, %v1420
    %1422 = vset.pattern.permute.xlu0 15
    %1423 = vperm.xlu0 %1422, %v1403
    %v1424 = vpop.permute.xlu0 %1423
    %v1426 = vmul.f32 %v1424, %v536
    %v1427 = vadd.f32 %v1421, %v1426
    %v1429 = vrot.slane %v1427, 7
    %v1431 = vadd.f32 %v395, %v1429
    %v1432 = vtanh.pop %v1431
    %v1433 = vmul.f32 %v1432, %v545
    %v1434 = vadd.f32 %v1433, %v548
    %v1436 = vrot.slane %v1397, 7
    %v1438 = vmul.f32 %v1434, %v1436
    %1440 = vrot.lane.b32.xlu0 %v1434, 120
    %v1441 = vpop.permute.xlu0 %1440
    %v1443 = vmul.f32 %v1434, %v1441
    %1445 = vrot.lane.b32.xlu0 %v1443, 4
    %v1446 = vpop.permute.xlu0 %1445
    %v1448 = vadd.f32 %v1438, %v1446
    %v1449 = vtanh.pop %v1448
    %1451 = vrot.lane.b32.xlu0 %v1449, 8
    %v1452 = vpop.permute.xlu0 %1451
    %v1454 = vmul.f32 %v1434, %v1452
    %vm1455 = vcmask 125026
    %v1456 = vsel %vm1455, %v1454, -inf
    %1457 = vmax.xlane.f32.xlu0 %v1456
    %v1458 = vpop.xlane.xlu0 %1457
    %v1459 = vsub.f32 %v1454, %v1458
    %v1460 = vmul.f32 %v1459, 1.442695
    %v1461 = vpow.pop %v1460
    %1463 = vrot.lane.b32.xlu0 %v1461, 116
    %v1464 = vpop.permute.xlu0 %1463
    %vm1466 = vcmask 26626
    %v1467 = vsel %vm1466, %v1464, 0.0
    %1468 = vadd.xlane.f32.xlu0 %v1467
    %v1469 = vpop.xlane.xlu0 %1468
    %v1470 = vrcp.pop %v1469
    %v1471 = vmul.f32 %v1461, %v1470
    %1473 = vrot.lane.b32.xlu0 %v1471, 116
    %v1474 = vpop.permute.xlu0 %1473
    %1476 = vst.msk [vmem:[#allocation2 - $0x2] sm:$0x4] %vm1466, %v1474
    // Predicated region
    $region14: #{tpu_custom_call.1} parent=1 // pred_check
      _
    $region15: #{tpu_custom_call.1} parent=1 // pred_check_branch
      %1478 = sbr.rel (0) target = $region17
    $region16: #{tpu_custom_call.1} parent=1 // pred_region
      %s1480 = ssub.s32 16, 16
      %1481 = vsyncadd [#allocation3], %s1480
      %s1483 = sshll.u32 [#allocation2], 4
      %s1484 = int_to_ptr.vmem [resolvable:$true] %s1483
      %1486 = dma.vmem_to_hbm [thread:$0]  %s1484, 16, %s3, [#allocation3]
    $region17: #{tpu_custom_call.1} parent=1 // pred_fallthru
      _
    // Predicated region
    $region18: #{tpu_custom_call.1} parent=1 // pred_check
      _
    $region19: #{tpu_custom_call.1} parent=1 // pred_check_branch
      %1488 = sbr.rel (0) target = $region21
    $region20: #{tpu_custom_call.1} parent=1 // pred_region
      %1489 = dma.done [#allocation3], 16
    $region21: #{tpu_custom_call.1} parent=1 // pred_fallthru
      _
    %1490 = vsyncpa [#allocation3], 1

</llo_original>
